<compile_context>
chip_gen: v7x
topology: tpu7x:2x2x1
jax: 0.10.0
libtpu: 0.0.40
codegen_flags: <defaults>
</compile_context>

<pallas_src>
import functools

import jax
import jax.numpy as jnp
from jax.experimental import pallas as pl
from jax.experimental.pallas import tpu as pltpu

BN_EPS = 1e-5      # nn.BatchNorm1d default
NORM_EPS = 1e-12   # F.normalize default


def projection_head_kernel(x_ref, w1_ref, b1_ref, g1_ref, be1_ref,
                           w2_ref, b2_ref, g2_ref, be2_ref,
                           out_ref, acc_ref):
    k = pl.program_id(0)
    nk = pl.num_programs(0)

    @pl.when(k == 0)
    def _():
        acc_ref[...] = jnp.zeros_like(acc_ref)

    # ---- W1 row-tile: h_tile[B, tk] = x @ W1[rows_k, :].T + b1[rows_k]
    # bf16 MXU operands, f32 accumulation; PyTorch (out, in) layout consumed
    # directly (contract x dim 1 with w1 dim 1) -> no wrapper transpose.
    x_bf = x_ref[...].astype(jnp.bfloat16)
    w1_bf = w1_ref[...].astype(jnp.bfloat16)
    h = jax.lax.dot_general(
        x_bf, w1_bf,
        dimension_numbers=(((1,), (1,)), ((), ())),
        preferred_element_type=jnp.float32)
    h = h + b1_ref[...]

    # ---- BN1 (training-mode batch stats, biased var), folded scale/shift.
    mean1 = jnp.mean(h, axis=0, keepdims=True)
    hc = h - mean1
    var1 = jnp.mean(hc * hc, axis=0, keepdims=True)
    scale1 = g1_ref[...] * jax.lax.rsqrt(var1 + BN_EPS)
    h = jnp.maximum(hc * scale1 + be1_ref[...], 0.0)           # ReLU

    # ---- accumulate: acc[B, A] += h_relu_tile @ W2[:, cols_k].T
    h_bf = h.astype(jnp.bfloat16)
    w2_bf = w2_ref[...].astype(jnp.bfloat16)
    acc_ref[...] += jax.lax.dot_general(
        h_bf, w2_bf,
        dimension_numbers=(((1,), (1,)), ((), ())),
        preferred_element_type=jnp.float32)

    # ---- finalize on the last reduction step: bias2 + BN2 + L2 normalize.
    @pl.when(k == nk - 1)
    def _():
        z = acc_ref[...] + b2_ref[...]
        mean2 = jnp.mean(z, axis=0, keepdims=True)
        zc = z - mean2
        var2 = jnp.mean(zc * zc, axis=0, keepdims=True)
        scale2 = g2_ref[...] * jax.lax.rsqrt(var2 + BN_EPS)
        z = zc * scale2 + be2_ref[...]
        nrm = jnp.sqrt(jnp.sum(z * z, axis=1, keepdims=True))
        out_ref[...] = (z / jnp.maximum(nrm, NORM_EPS)).astype(out_ref.dtype)


@functools.partial(jax.jit, static_argnames=("tk",))
def projection_head_forward(x, w1, b1, g1, be1, w2, b2, g2, be2, *, tk=128):
    """x: [B, Din]; w1: [Din, Din], w2: [A, Din] in PyTorch (out, in) layout."""
    B, Din = x.shape
    A = w2.shape[0]
    tk = min(tk, Din)
    assert Din % tk == 0, "hidden dim must be a multiple of the tile size"
    nk = Din // tk

    # 1-D params as (1, N) rows — layout-only, no data movement. Weight
    # matrices are NOT transposed; the kernel contracts them in place.
    b1r, g1r, be1r = (p.reshape(1, Din) for p in (b1, g1, be1))
    b2r, g2r, be2r = (p.reshape(1, A) for p in (b2, g2, be2))

    grid_spec = pltpu.PrefetchScalarGridSpec(
        num_scalar_prefetch=0,
        grid=(nk,),
        in_specs=[
            pl.BlockSpec((B, Din), lambda k: (0, 0)),    # x (VMEM-resident)
            pl.BlockSpec((tk, Din), lambda k: (k, 0)),   # W1 row-tile (streamed)
            pl.BlockSpec((1, tk), lambda k: (0, k)),     # b1 tile
            pl.BlockSpec((1, tk), lambda k: (0, k)),     # BN1 gamma tile
            pl.BlockSpec((1, tk), lambda k: (0, k)),     # BN1 beta tile
            pl.BlockSpec((A, tk), lambda k: (0, k)),     # W2 col-tile (streamed)
            pl.BlockSpec((1, A), lambda k: (0, 0)),      # b2
            pl.BlockSpec((1, A), lambda k: (0, 0)),      # BN2 gamma
            pl.BlockSpec((1, A), lambda k: (0, 0)),      # BN2 beta
        ],
        out_specs=pl.BlockSpec((B, A), lambda k: (0, 0)),
        scratch_shapes=[pltpu.VMEM((B, A), jnp.float32)],
    )

    cost = pl.CostEstimate(
        flops=2 * B * Din * Din + 2 * B * Din * A,
        transcendentals=0,
        bytes_accessed=4 * (x.size + w1.size + w2.size + B * A
                            + 3 * Din + 3 * A),
    )

    return pl.pallas_call(
        projection_head_kernel,
        out_shape=jax.ShapeDtypeStruct((B, A), jnp.float32),
        grid_spec=grid_spec,
        compiler_params=pltpu.CompilerParams(
            dimension_semantics=("arbitrary",),        # reduction over hidden dim
            vmem_limit_bytes=32 * 1024 * 1024,         # fits v7x's 64 MiB VMEM
        ),
        cost_estimate=cost,
    )(x, w1, b1r, g1r, be1r, w2, b2r, g2r, be2r)


def _bn(h, g, b):
    m = jnp.mean(h, axis=0, keepdims=True)
    v = jnp.mean((h - m) ** 2, axis=0, keepdims=True)
    return (h - m) / jnp.sqrt(v + BN_EPS) * g + b


def reference_forward_f32(x, w1, b1, g1, be1, w2, b2, g2, be2):
    h = x @ w1.T + b1
    h = jnp.maximum(_bn(h, g1, be1), 0.0)
    z = h @ w2.T + b2
    z = _bn(z, g2, be2)
    n = jnp.sqrt(jnp.sum(z * z, axis=1, keepdims=True))
    return z / jnp.maximum(n, NORM_EPS)


def reference_forward_bf16_matched(x, w1, b1, g1, be1, w2, b2, g2, be2):
    """Mirror of the kernel numerics (bf16 matmul operands, f32 accum)."""
    dn = (((1,), (1,)), ((), ()))
    h = jax.lax.dot_general(x.astype(jnp.bfloat16), w1.astype(jnp.bfloat16),
                            dimension_numbers=dn,
                            preferred_element_type=jnp.float32) + b1
    h = jnp.maximum(_bn(h, g1, be1), 0.0)
    z = jax.lax.dot_general(h.astype(jnp.bfloat16), w2.astype(jnp.bfloat16),
                            dimension_numbers=dn,
                            preferred_element_type=jnp.float32) + b2
    z = _bn(z, g2, be2)
    n = jnp.sqrt(jnp.sum(z * z, axis=1, keepdims=True))
    return z / jnp.maximum(n, NORM_EPS)


if __name__ == "__main__":
    # Small but MXU-row-filling shapes consistent with the module
    # (in_dim=512 scaled to 256, out_dim=128 as in the default).
    B, D_IN, D_OUT = 128, 256, 128

    key = jax.random.PRNGKey(0)
    kx, kw1, kb1, kg1, kbe1, kw2, kb2, kg2, kbe2 = jax.random.split(key, 9)

    x = jax.random.normal(kx, (B, D_IN), dtype=jnp.float32)
    # PyTorch layouts / init_weights-style scales (small perturbations added
    # to biases & BN affine so every code path is exercised).
    w1 = 0.01 * jax.random.normal(kw1, (D_IN, D_IN), dtype=jnp.float32)
    b1 = 0.01 * jax.random.normal(kb1, (D_IN,), dtype=jnp.float32)
    g1 = 1.0 + 0.1 * jax.random.normal(kg1, (D_IN,), dtype=jnp.float32)
    be1 = 0.1 * jax.random.normal(kbe1, (D_IN,), dtype=jnp.float32)
    w2 = 0.01 * jax.random.normal(kw2, (D_OUT, D_IN), dtype=jnp.float32)
    b2 = 0.01 * jax.random.normal(kb2, (D_OUT,), dtype=jnp.float32)
    g2 = 1.0 + 0.1 * jax.random.normal(kg2, (D_OUT,), dtype=jnp.float32)
    be2 = 0.1 * jax.random.normal(kbe2, (D_OUT,), dtype=jnp.float32)

    out = projection_head_forward(x, w1, b1, g1, be1, w2, b2, g2, be2, tk=128)
    out = jax.block_until_ready(out)
    assert out.shape == (B, D_OUT)

    # Tight check vs a reference that mirrors the kernel's bf16-in / f32-acc
    # matmuls (validates the fused BN/ReLU/normalize structure).
    ref_m = reference_forward_bf16_matched(x, w1, b1, g1, be1, w2, b2, g2, be2)
    err_m = float(jnp.max(jnp.abs(out - ref_m)))
    assert err_m < 1e-3, f"matched-ref max abs err {err_m}"

    # Looser check vs the pure-f32 PyTorch semantics (bf16 operand rounding).
    ref_f = reference_forward_f32(x, w1, b1, g1, be1, w2, b2, g2, be2)
    err_f = float(jnp.max(jnp.abs(out - ref_f)))
    assert err_f < 1e-2, f"f32-ref max abs err {err_f}"

    print("KERNEL_OK")
</pallas_src>

<mosaic_0001>
module attributes {stable_mosaic.version = 11 : i64} {
  func.func @projection_head_kernel(%arg0: i32, %arg1: memref<128x256xf32, #tpu.memory_space<vmem>>, %arg2: memref<128x256xf32, #tpu.memory_space<vmem>>, %arg3: memref<1x128xf32, #tpu.memory_space<vmem>>, %arg4: memref<1x128xf32, #tpu.memory_space<vmem>>, %arg5: memref<1x128xf32, #tpu.memory_space<vmem>>, %arg6: memref<128x128xf32, #tpu.memory_space<vmem>>, %arg7: memref<1x128xf32, #tpu.memory_space<vmem>>, %arg8: memref<1x128xf32, #tpu.memory_space<vmem>>, %arg9: memref<1x128xf32, #tpu.memory_space<vmem>>, %arg10: memref<128x128xf32, #tpu.memory_space<vmem>>, %arg11: memref<128x128xf32, #tpu.memory_space<vmem>>) attributes {dimension_semantics = [#tpu.dimension_semantics<arbitrary>], iteration_bounds = array<i64: 2>, scalar_prefetch = 0 : i64, scratch_operands = 1 : i64, tpu.core_type = #tpu.core_type<tc>, window_params = [{pipeline_mode = #tpu.pipeline_mode<synchronous>, transform_indices = @transform_0, window_bounds = array<i64: 128, 256>}, {transform_indices = @transform_1, window_bounds = array<i64: 128, 256>}, {transform_indices = @transform_2, window_bounds = array<i64: 1, 128>}, {transform_indices = @transform_3, window_bounds = array<i64: 1, 128>}, {transform_indices = @transform_4, window_bounds = array<i64: 1, 128>}, {transform_indices = @transform_5, window_bounds = array<i64: 128, 128>}, {pipeline_mode = #tpu.pipeline_mode<synchronous>, transform_indices = @transform_6, window_bounds = array<i64: 1, 128>}, {pipeline_mode = #tpu.pipeline_mode<synchronous>, transform_indices = @transform_7, window_bounds = array<i64: 1, 128>}, {pipeline_mode = #tpu.pipeline_mode<synchronous>, transform_indices = @transform_8, window_bounds = array<i64: 1, 128>}, {pipeline_mode = #tpu.pipeline_mode<synchronous>, transform_indices = @transform_9, window_bounds = array<i64: 128, 128>}]} {
    %c0_i32 = arith.constant 0 : i32
    %0 = arith.cmpi eq, %arg0, %c0_i32 : i32
    %1 = arith.extui %0 : i1 to i32
    %c0_i32_0 = arith.constant 0 : i32
    %2 = arith.cmpi ne, %1, %c0_i32_0 : i32
    scf.if %2 {
      %cst_24 = arith.constant 0.000000e+00 : f32
      %44 = vector.broadcast %cst_24 : f32 to vector<128x128xf32>
      %c0_25 = arith.constant 0 : index
      %c0_26 = arith.constant 0 : index
      %45 = vector.load %arg11[%c0_25, %c0_26] : memref<128x128xf32, #tpu.memory_space<vmem>>, vector<128x128xf32>
      tpu.vector_store %arg11[%c0_25, %c0_26], %44 {strides = array<i32>} : memref<128x128xf32, #tpu.memory_space<vmem>>, vector<128x128xf32>,
    } else {
    }
    %c0 = arith.constant 0 : index
    %c0_1 = arith.constant 0 : index
    %3 = vector.load %arg1[%c0, %c0_1] : memref<128x256xf32, #tpu.memory_space<vmem>>, vector<128x256xf32>
    %4 = arith.truncf %3 : vector<128x256xf32> to vector<128x256xbf16>
    %c0_2 = arith.constant 0 : index
    %c0_3 = arith.constant 0 : index
    %5 = vector.load %arg2[%c0_2, %c0_3] : memref<128x256xf32, #tpu.memory_space<vmem>>, vector<128x256xf32>
    %6 = arith.truncf %5 : vector<128x256xf32> to vector<128x256xbf16>
    %cst = arith.constant dense<0.000000e+00> : vector<128x128xf32>
    %7 = tpu.matmul %4, %6, %cst {dimension_numbers = #tpu.dot_dimension_numbers<[1], [1], [0], [0], [0, 0, 1, 0], [], []>} : vector<128x256xbf16>, vector<128x256xbf16>, vector<128x128xf32> -> vector<128x128xf32>
    %c0_4 = arith.constant 0 : index
    %c0_5 = arith.constant 0 : index
    %8 = vector.load %arg3[%c0_4, %c0_5] : memref<1x128xf32, #tpu.memory_space<vmem>>, vector<1x128xf32>
    %9 = vector.broadcast %8 : vector<1x128xf32> to vector<128x128xf32>
    %10 = arith.addf %7, %9 : vector<128x128xf32>
    %cst_6 = arith.constant dense<0.000000e+00> : vector<128xf32>
    %11 = vector.multi_reduction <add>, %10, %cst_6 [0] : vector<128x128xf32> to vector<128xf32>
    %12 = vector.shape_cast %11 : vector<128xf32> to vector<1x128xf32>
    %cst_7 = arith.constant 1.280000e+02 : f32
    %13 = vector.broadcast %cst_7 : f32 to vector<1x128xf32>
    %14 = arith.divf %12, %13 : vector<1x128xf32>
    %15 = vector.broadcast %14 : vector<1x128xf32> to vector<128x128xf32>
    %16 = arith.subf %10, %15 : vector<128x128xf32>
    %17 = arith.mulf %16, %16 : vector<128x128xf32>
    %cst_8 = arith.constant dense<0.000000e+00> : vector<128xf32>
    %18 = vector.multi_reduction <add>, %17, %cst_8 [0] : vector<128x128xf32> to vector<128xf32>
    %19 = vector.shape_cast %18 : vector<128xf32> to vector<1x128xf32>
    %cst_9 = arith.constant 1.280000e+02 : f32
    %20 = vector.broadcast %cst_9 : f32 to vector<1x128xf32>
    %21 = arith.divf %19, %20 : vector<1x128xf32>
    %c0_10 = arith.constant 0 : index
    %c0_11 = arith.constant 0 : index
    %22 = vector.load %arg4[%c0_10, %c0_11] : memref<1x128xf32, #tpu.memory_space<vmem>>, vector<1x128xf32>
    %cst_12 = arith.constant 9.99999974E-6 : f32
    %23 = vector.broadcast %cst_12 : f32 to vector<1x128xf32>
    %24 = arith.addf %21, %23 : vector<1x128xf32>
    %25 = math.rsqrt %24 : vector<1x128xf32>
    %26 = arith.mulf %22, %25 : vector<1x128xf32>
    %27 = vector.broadcast %26 : vector<1x128xf32> to vector<128x128xf32>
    %28 = arith.mulf %16, %27 : vector<128x128xf32>
    %c0_13 = arith.constant 0 : index
    %c0_14 = arith.constant 0 : index
    %29 = vector.load %arg5[%c0_13, %c0_14] : memref<1x128xf32, #tpu.memory_space<vmem>>, vector<1x128xf32>
    %30 = vector.broadcast %29 : vector<1x128xf32> to vector<128x128xf32>
    %31 = arith.addf %28, %30 : vector<128x128xf32>
    %cst_15 = arith.constant 0.000000e+00 : f32
    %32 = vector.broadcast %cst_15 : f32 to vector<128x128xf32>
    %33 = arith.maximumf %31, %32 : vector<128x128xf32>
    %34 = arith.truncf %33 : vector<128x128xf32> to vector<128x128xbf16>
    %c0_16 = arith.constant 0 : index
    %c0_17 = arith.constant 0 : index
    %35 = vector.load %arg6[%c0_16, %c0_17] : memref<128x128xf32, #tpu.memory_space<vmem>>, vector<128x128xf32>
    %36 = arith.truncf %35 : vector<128x128xf32> to vector<128x128xbf16>
    %c0_18 = arith.constant 0 : index
    %c0_19 = arith.constant 0 : index
    %37 = vector.load %arg11[%c0_18, %c0_19] : memref<128x128xf32, #tpu.memory_space<vmem>>, vector<128x128xf32>
    %cst_20 = arith.constant dense<0.000000e+00> : vector<128x128xf32>
    %38 = tpu.matmul %34, %36, %cst_20 {dimension_numbers = #tpu.dot_dimension_numbers<[1], [1], [0], [0], [0, 0, 1, 0], [], []>} : vector<128x128xbf16>, vector<128x128xbf16>, vector<128x128xf32> -> vector<128x128xf32>
    %39 = arith.addf %37, %38 : vector<128x128xf32>
    %c0_21 = arith.constant 0 : index
    %c0_22 = arith.constant 0 : index
    %40 = vector.load %arg11[%c0_21, %c0_22] : memref<128x128xf32, #tpu.memory_space<vmem>>, vector<128x128xf32>
    tpu.vector_store %arg11[%c0_21, %c0_22], %39 {strides = array<i32>} : memref<128x128xf32, #tpu.memory_space<vmem>>, vector<128x128xf32>,
    %c1_i32 = arith.constant 1 : i32
    %41 = arith.cmpi eq, %arg0, %c1_i32 : i32
    %42 = arith.extui %41 : i1 to i32
    %c0_i32_23 = arith.constant 0 : i32
    %43 = arith.cmpi ne, %42, %c0_i32_23 : i32
    scf.if %43 {
      %c0_24 = arith.constant 0 : index
      %c0_25 = arith.constant 0 : index
      %44 = vector.load %arg11[%c0_24, %c0_25] : memref<128x128xf32, #tpu.memory_space<vmem>>, vector<128x128xf32>
      %c0_26 = arith.constant 0 : index
      %c0_27 = arith.constant 0 : index
      %45 = vector.load %arg7[%c0_26, %c0_27] : memref<1x128xf32, #tpu.memory_space<vmem>>, vector<1x128xf32>
      %46 = vector.broadcast %45 : vector<1x128xf32> to vector<128x128xf32>
      %47 = arith.addf %44, %46 : vector<128x128xf32>
      %cst_28 = arith.constant dense<0.000000e+00> : vector<128xf32>
      %48 = vector.multi_reduction <add>, %47, %cst_28 [0] : vector<128x128xf32> to vector<128xf32>
      %49 = vector.shape_cast %48 : vector<128xf32> to vector<1x128xf32>
      %cst_29 = arith.constant 1.280000e+02 : f32
      %50 = vector.broadcast %cst_29 : f32 to vector<1x128xf32>
      %51 = arith.divf %49, %50 : vector<1x128xf32>
      %52 = vector.broadcast %51 : vector<1x128xf32> to vector<128x128xf32>
      %53 = arith.subf %47, %52 : vector<128x128xf32>
      %54 = arith.mulf %53, %53 : vector<128x128xf32>
      %cst_30 = arith.constant dense<0.000000e+00> : vector<128xf32>
      %55 = vector.multi_reduction <add>, %54, %cst_30 [0] : vector<128x128xf32> to vector<128xf32>
      %56 = vector.shape_cast %55 : vector<128xf32> to vector<1x128xf32>
      %cst_31 = arith.constant 1.280000e+02 : f32
      %57 = vector.broadcast %cst_31 : f32 to vector<1x128xf32>
      %58 = arith.divf %56, %57 : vector<1x128xf32>
      %c0_32 = arith.constant 0 : index
      %c0_33 = arith.constant 0 : index
      %59 = vector.load %arg8[%c0_32, %c0_33] : memref<1x128xf32, #tpu.memory_space<vmem>>, vector<1x128xf32>
      %cst_34 = arith.constant 9.99999974E-6 : f32
      %60 = vector.broadcast %cst_34 : f32 to vector<1x128xf32>
      %61 = arith.addf %58, %60 : vector<1x128xf32>
      %62 = math.rsqrt %61 : vector<1x128xf32>
      %63 = arith.mulf %59, %62 : vector<1x128xf32>
      %64 = vector.broadcast %63 : vector<1x128xf32> to vector<128x128xf32>
      %65 = arith.mulf %53, %64 : vector<128x128xf32>
      %c0_35 = arith.constant 0 : index
      %c0_36 = arith.constant 0 : index
      %66 = vector.load %arg9[%c0_35, %c0_36] : memref<1x128xf32, #tpu.memory_space<vmem>>, vector<1x128xf32>
      %67 = vector.broadcast %66 : vector<1x128xf32> to vector<128x128xf32>
      %68 = arith.addf %65, %67 : vector<128x128xf32>
      %69 = arith.mulf %68, %68 : vector<128x128xf32>
      %cst_37 = arith.constant dense<0.000000e+00> : vector<128xf32>
      %70 = vector.multi_reduction <add>, %69, %cst_37 [1] : vector<128x128xf32> to vector<128xf32>
      %71 = vector.shape_cast %70 : vector<128xf32> to vector<128x1xf32>
      %72 = math.sqrt %71 : vector<128x1xf32>
      %cst_38 = arith.constant 9.99999996E-13 : f32
      %73 = vector.broadcast %cst_38 : f32 to vector<128x1xf32>
      %74 = arith.maximumf %72, %73 : vector<128x1xf32>
      %75 = vector.broadcast %74 : vector<128x1xf32> to vector<128x128xf32>
      %76 = arith.divf %68, %75 : vector<128x128xf32>
      %c0_39 = arith.constant 0 : index
      %c0_40 = arith.constant 0 : index
      %77 = vector.load %arg10[%c0_39, %c0_40] : memref<128x128xf32, #tpu.memory_space<vmem>>, vector<128x128xf32>
      tpu.vector_store %arg10[%c0_39, %c0_40], %76 {strides = array<i32>} : memref<128x128xf32, #tpu.memory_space<vmem>>, vector<128x128xf32>,
    } else {
    }
    return
  }
  func.func @transform_0(%arg0: i32) -> (i32, i32) {
    %c0_i32 = arith.constant 0 : i32
    %c0_i32_0 = arith.constant 0 : i32
    %c0_i32_1 = arith.constant 0 : i32
    return %c0_i32, %c0_i32_0 : i32, i32
  }
  func.func @transform_1(%arg0: i32) -> (i32, i32) {
    %c0_i32 = arith.constant 0 : i32
    %c0_i32_0 = arith.constant 0 : i32
    return %arg0, %c0_i32 : i32, i32
  }
  func.func @transform_2(%arg0: i32) -> (i32, i32) {
    %c0_i32 = arith.constant 0 : i32
    %c0_i32_0 = arith.constant 0 : i32
    return %c0_i32, %arg0 : i32, i32
  }
  func.func @transform_3(%arg0: i32) -> (i32, i32) {
    %c0_i32 = arith.constant 0 : i32
    %c0_i32_0 = arith.constant 0 : i32
    return %c0_i32, %arg0 : i32, i32
  }
  func.func @transform_4(%arg0: i32) -> (i32, i32) {
    %c0_i32 = arith.constant 0 : i32
    %c0_i32_0 = arith.constant 0 : i32
    return %c0_i32, %arg0 : i32, i32
  }
  func.func @transform_5(%arg0: i32) -> (i32, i32) {
    %c0_i32 = arith.constant 0 : i32
    %c0_i32_0 = arith.constant 0 : i32
    return %c0_i32, %arg0 : i32, i32
  }
  func.func @transform_6(%arg0: i32) -> (i32, i32) {
    %c0_i32 = arith.constant 0 : i32
    %c0_i32_0 = arith.constant 0 : i32
    %c0_i32_1 = arith.constant 0 : i32
    return %c0_i32, %c0_i32_0 : i32, i32
  }
  func.func @transform_7(%arg0: i32) -> (i32, i32) {
    %c0_i32 = arith.constant 0 : i32
    %c0_i32_0 = arith.constant 0 : i32
    %c0_i32_1 = arith.constant 0 : i32
    return %c0_i32, %c0_i32_0 : i32, i32
  }
  func.func @transform_8(%arg0: i32) -> (i32, i32) {
    %c0_i32 = arith.constant 0 : i32
    %c0_i32_0 = arith.constant 0 : i32
    %c0_i32_1 = arith.constant 0 : i32
    return %c0_i32, %c0_i32_0 : i32, i32
  }
  func.func @transform_9(%arg0: i32) -> (i32, i32) {
    %c0_i32 = arith.constant 0 : i32
    %c0_i32_0 = arith.constant 0 : i32
    %c0_i32_1 = arith.constant 0 : i32
    return %c0_i32, %c0_i32_0 : i32, i32
  }
}

</mosaic_0001>

<llo_original>
// kernel: projection_head_forward.1
$region0: #{projection_head_forward.1}
  #allocation0 [shape = 'u32[]', space=smem, size = 0x4, offset = 0x4, fixed_abs, tag = 'smem constant byte address 0x4 - core index']
  #allocation1 [shape = 'u32[144,128]{1,0:T(1,128)}', space=vmem, size = 0x12000, scoped, tag = 'internal scratch']
  #allocation2 [shape = 'f32[128,128]{1,0:T(8,128)}', space=vmem, size = 0x10000, scoped, tag = 'scratch operand']
  %s0 = inlined_call_operand.hbm [shape: f32[128,256], index: 0, kind: input, shape index: {}]
  %s1 = inlined_call_operand.hbm [shape: f32[256,256], index: 1, kind: input, shape index: {}]
  %s2 = inlined_call_operand.vmem [shape: f32[1,256], index: 2, kind: input, shape index: {}]
  %s3 = inlined_call_operand.vmem [shape: f32[1,256], index: 3, kind: input, shape index: {}]
  %s4 = inlined_call_operand.vmem [shape: f32[1,256], index: 4, kind: input, shape index: {}]
  %s5 = inlined_call_operand.hbm [shape: f32[128,256], index: 5, kind: input, shape index: {}]
  %s6 = inlined_call_operand.vmem [shape: f32[1,128], index: 6, kind: input, shape index: {}]
  %s7 = inlined_call_operand.vmem [shape: f32[1,128], index: 7, kind: input, shape index: {}]
  %s8 = inlined_call_operand.vmem [shape: f32[1,128], index: 8, kind: input, shape index: {}]
  %s9 = inlined_call_operand.hbm [shape: f32[128,128], index: 9, kind: output, shape index: {}]
  %s10 = sld [smem:[#allocation0]]
  $region89: #{projection_head_forward.1} parent=0
    _
  %s12 = ssub.s32 1, %s10
  %s13 = scalar_select 0, %s12, %s10
  $region1: #{projection_head_forward.1} parent=0
    #allocation3 [shape = 'u8[131072]{0}', space=vmem, size = 0x20000, scoped, tag = 'input window, operand 0, single buffered']
    #allocation4 [shape = 's32[2]{0}', space=sflag, size = 0x8, scoped, tag = 'scoped memory for projection_head_forward.1']
    #allocation5 [shape = 's32[2]{0}', space=sflag, size = 0x8, scoped, tag = 'scoped memory for projection_head_forward.1']
    #allocation6 [shape = 'u8[262144]{0}', space=vmem, size = 0x40000, scoped, tag = 'input window, operand 1']
    #allocation7 [shape = 's32[2]{0}', space=sflag, size = 0x8, scoped, tag = 'scoped memory for projection_head_forward.1']
    #allocation8 [shape = 'u8[131072]{0}', space=vmem, size = 0x20000, scoped, tag = 'input window, operand 5']
    #allocation9 [shape = 'u8[65536]{0}', space=vmem, size = 0x10000, scoped, tag = 'output window, operand 0, single buffered']
    %14 = vsyncpa [#allocation4], 0
    %15 = vsyncpa [#allocation7], 0
    %s16 = scalar_lea.sflag [#allocation7], 1
    %17 = vsyncpa %s16, 0
    %18 = vsyncpa [#allocation5], 0
    loop: start=0, step=1, limit=4
    $region2: #{projection_head_forward.1} parent=1 // loop_pre_header
      _
    $region3: #{projection_head_forward.1} parent=1 // loop_header
      %s20 = sphi 0, %s24
      %p21 = scmp.ge.s32.totalorder %s20, 4
      %s28 = sphi 0, %s28
      %s30 = sphi 0, %s28
      %s31 = sphi 0, %s30
      %s45 = sphi 0, %s31
      %s51 = sphi 0, %s53
      %s54 = sphi 0, %s51
      %s55 = sphi 0, %s54
      %s71 = sphi 0, %s55
      %s77 = sphi 0, %s79
      %s80 = sphi 0, %s77
      %s81 = sphi 0, %s80
      %s97 = sphi 0, %s81
      %s103 = sphi 0, %s105
      %s106 = sphi 0, %s103
      %s107 = sphi 0, %s106
      %s123 = sphi 0, %s107
      %s129 = sphi 0, %s131
      %s132 = sphi 0, %s129
      %s133 = sphi 0, %s132
      %s149 = sphi 0, %s133
      %s155 = sphi 0, %s157
      %s158 = sphi 0, %s155
      %s159 = sphi 0, %s158
      %s175 = sphi 0, %s159
      %s179 = sphi 0, %s179
      %s181 = sphi 0, %s179
      %s182 = sphi 0, %s181
      %s196 = sphi 0, %s182
      %s200 = sphi 0, %s200
      %s202 = sphi 0, %s200
      %s203 = sphi 0, %s202
      %s217 = sphi 0, %s203
      %s221 = sphi 0, %s221
      %s223 = sphi 0, %s221
      %s224 = sphi 0, %s223
      %s238 = sphi 0, %s224
      %s242 = sphi 0, %s242
      %s244 = sphi 0, %s242
      %s245 = sphi 0, %s244
      %s259 = sphi 0, %s245
    $region4: #{projection_head_forward.1} parent=1 // loop_header_branch
      %23 = sbr.rel (%p21) target = $region8
    $region5: #{projection_head_forward.1} parent=1 // loop_body
      %s25 = ssub.s32 %s20, 1
      %s26 = ssub.s32 %s20, 2
      %s27 = sadd.s32 %s20, 1
      %s29 = sadd.s32 %s28, 1
      %p32 = scmp.eq.s32.totalorder %s20, 1
      %p33 = scmp.ne.s32.totalorder %s28, %s30
      %p34 = scmp.eq.s32.totalorder %s20, 0
      %p35 = por %p33, %p34
      %p36 = scmp.ne.s32.totalorder %s28, %s30
      %p37 = scmp.eq.s32.totalorder %s25, 1
      %p38 = por %p36, %p37
      %p39 = scmp.ne.s32.totalorder %s30, %s31
      %p40 = scmp.eq.s32.totalorder %s25, 0
      %p41 = por %p39, %p40
      %p42 = scmp.ne.s32.totalorder %s30, %s31
      %p43 = scmp.eq.s32.totalorder %s26, 1
      %p44 = por %p42, %p43
      %p46 = scmp.ne.s32.totalorder %s31, %s45
      %p47 = scmp.eq.s32.totalorder %s26, 0
      %p48 = por %p46, %p47
      %s49 = ssub.s32 %s20, %s27
      %p50 = scmp.eq.s32.totalorder %s49, 0
      %s52 = sadd.s32 %s51, 1
      %s53 = scalar_select %p50, %s51, %s52
      %p56 = pneg %p50
      %p57 = scmp.eq.s32.totalorder %s20, 1
      %p58 = por %p56, %p57
      %p59 = scmp.ne.s32.totalorder %s51, %s54
      %p60 = scmp.eq.s32.totalorder %s20, 0
      %p61 = por %p59, %p60
      %p62 = scmp.ne.s32.totalorder %s51, %s54
      %p63 = scmp.eq.s32.totalorder %s25, 1
      %p64 = por %p62, %p63
      %p65 = scmp.ne.s32.totalorder %s54, %s55
      %p66 = scmp.eq.s32.totalorder %s25, 0
      %p67 = por %p65, %p66
      %p68 = scmp.ne.s32.totalorder %s54, %s55
      %p69 = scmp.eq.s32.totalorder %s26, 1
      %p70 = por %p68, %p69
      %p72 = scmp.ne.s32.totalorder %s55, %s71
      %p73 = scmp.eq.s32.totalorder %s26, 0
      %p74 = por %p72, %p73
      %s75 = ssub.s32 %s20, %s27
      %p76 = scmp.eq.s32.totalorder %s75, 0
      %s78 = sadd.s32 %s77, 1
      %s79 = scalar_select %p76, %s77, %s78
      %p82 = pneg %p76
      %p83 = scmp.eq.s32.totalorder %s20, 1
      %p84 = por %p82, %p83
      %p85 = scmp.ne.s32.totalorder %s77, %s80
      %p86 = scmp.eq.s32.totalorder %s20, 0
      %p87 = por %p85, %p86
      %p88 = scmp.ne.s32.totalorder %s77, %s80
      %p89 = scmp.eq.s32.totalorder %s25, 1
      %p90 = por %p88, %p89
      %p91 = scmp.ne.s32.totalorder %s80, %s81
      %p92 = scmp.eq.s32.totalorder %s25, 0
      %p93 = por %p91, %p92
      %p94 = scmp.ne.s32.totalorder %s80, %s81
      %p95 = scmp.eq.s32.totalorder %s26, 1
      %p96 = por %p94, %p95
      %p98 = scmp.ne.s32.totalorder %s81, %s97
      %p99 = scmp.eq.s32.totalorder %s26, 0
      %p100 = por %p98, %p99
      %s101 = ssub.s32 %s20, %s27
      %p102 = scmp.eq.s32.totalorder %s101, 0
      %s104 = sadd.s32 %s103, 1
      %s105 = scalar_select %p102, %s103, %s104
      %p108 = pneg %p102
      %p109 = scmp.eq.s32.totalorder %s20, 1
      %p110 = por %p108, %p109
      %p111 = scmp.ne.s32.totalorder %s103, %s106
      %p112 = scmp.eq.s32.totalorder %s20, 0
      %p113 = por %p111, %p112
      %p114 = scmp.ne.s32.totalorder %s103, %s106
      %p115 = scmp.eq.s32.totalorder %s25, 1
      %p116 = por %p114, %p115
      %p117 = scmp.ne.s32.totalorder %s106, %s107
      %p118 = scmp.eq.s32.totalorder %s25, 0
      %p119 = por %p117, %p118
      %p120 = scmp.ne.s32.totalorder %s106, %s107
      %p121 = scmp.eq.s32.totalorder %s26, 1
      %p122 = por %p120, %p121
      %p124 = scmp.ne.s32.totalorder %s107, %s123
      %p125 = scmp.eq.s32.totalorder %s26, 0
      %p126 = por %p124, %p125
      %s127 = ssub.s32 %s20, %s27
      %p128 = scmp.eq.s32.totalorder %s127, 0
      %s130 = sadd.s32 %s129, 1
      %s131 = scalar_select %p128, %s129, %s130
      %p134 = pneg %p128
      %p135 = scmp.eq.s32.totalorder %s20, 1
      %p136 = por %p134, %p135
      %p137 = scmp.ne.s32.totalorder %s129, %s132
      %p138 = scmp.eq.s32.totalorder %s20, 0
      %p139 = por %p137, %p138
      %p140 = scmp.ne.s32.totalorder %s129, %s132
      %p141 = scmp.eq.s32.totalorder %s25, 1
      %p142 = por %p140, %p141
      %p143 = scmp.ne.s32.totalorder %s132, %s133
      %p144 = scmp.eq.s32.totalorder %s25, 0
      %p145 = por %p143, %p144
      %p146 = scmp.ne.s32.totalorder %s132, %s133
      %p147 = scmp.eq.s32.totalorder %s26, 1
      %p148 = por %p146, %p147
      %p150 = scmp.ne.s32.totalorder %s133, %s149
      %p151 = scmp.eq.s32.totalorder %s26, 0
      %p152 = por %p150, %p151
      %s153 = ssub.s32 %s20, %s27
      %p154 = scmp.eq.s32.totalorder %s153, 0
      %s156 = sadd.s32 %s155, 1
      %s157 = scalar_select %p154, %s155, %s156
      %p160 = pneg %p154
      %p161 = scmp.eq.s32.totalorder %s20, 1
      %p162 = por %p160, %p161
      %p163 = scmp.ne.s32.totalorder %s155, %s158
      %p164 = scmp.eq.s32.totalorder %s20, 0
      %p165 = por %p163, %p164
      %p166 = scmp.ne.s32.totalorder %s155, %s158
      %p167 = scmp.eq.s32.totalorder %s25, 1
      %p168 = por %p166, %p167
      %p169 = scmp.ne.s32.totalorder %s158, %s159
      %p170 = scmp.eq.s32.totalorder %s25, 0
      %p171 = por %p169, %p170
      %p172 = scmp.ne.s32.totalorder %s158, %s159
      %p173 = scmp.eq.s32.totalorder %s26, 1
      %p174 = por %p172, %p173
      %p176 = scmp.ne.s32.totalorder %s159, %s175
      %p177 = scmp.eq.s32.totalorder %s26, 0
      %p178 = por %p176, %p177
      %s180 = sadd.s32 %s179, 1
      %p183 = scmp.eq.s32.totalorder %s20, 1
      %p184 = scmp.ne.s32.totalorder %s179, %s181
      %p185 = scmp.eq.s32.totalorder %s20, 0
      %p186 = por %p184, %p185
      %p187 = scmp.ne.s32.totalorder %s179, %s181
      %p188 = scmp.eq.s32.totalorder %s25, 1
      %p189 = por %p187, %p188
      %p190 = scmp.ne.s32.totalorder %s181, %s182
      %p191 = scmp.eq.s32.totalorder %s25, 0
      %p192 = por %p190, %p191
      %p193 = scmp.ne.s32.totalorder %s181, %s182
      %p194 = scmp.eq.s32.totalorder %s26, 1
      %p195 = por %p193, %p194
      %p197 = scmp.ne.s32.totalorder %s182, %s196
      %p198 = scmp.eq.s32.totalorder %s26, 0
      %p199 = por %p197, %p198
      %s201 = sadd.s32 %s200, 1
      %p204 = scmp.eq.s32.totalorder %s20, 1
      %p205 = scmp.ne.s32.totalorder %s200, %s202
      %p206 = scmp.eq.s32.totalorder %s20, 0
      %p207 = por %p205, %p206
      %p208 = scmp.ne.s32.totalorder %s200, %s202
      %p209 = scmp.eq.s32.totalorder %s25, 1
      %p210 = por %p208, %p209
      %p211 = scmp.ne.s32.totalorder %s202, %s203
      %p212 = scmp.eq.s32.totalorder %s25, 0
      %p213 = por %p211, %p212
      %p214 = scmp.ne.s32.totalorder %s202, %s203
      %p215 = scmp.eq.s32.totalorder %s26, 1
      %p216 = por %p214, %p215
      %p218 = scmp.ne.s32.totalorder %s203, %s217
      %p219 = scmp.eq.s32.totalorder %s26, 0
      %p220 = por %p218, %p219
      %s222 = sadd.s32 %s221, 1
      %p225 = scmp.eq.s32.totalorder %s20, 1
      %p226 = scmp.ne.s32.totalorder %s221, %s223
      %p227 = scmp.eq.s32.totalorder %s20, 0
      %p228 = por %p226, %p227
      %p229 = scmp.ne.s32.totalorder %s221, %s223
      %p230 = scmp.eq.s32.totalorder %s25, 1
      %p231 = por %p229, %p230
      %p232 = scmp.ne.s32.totalorder %s223, %s224
      %p233 = scmp.eq.s32.totalorder %s25, 0
      %p234 = por %p232, %p233
      %p235 = scmp.ne.s32.totalorder %s223, %s224
      %p236 = scmp.eq.s32.totalorder %s26, 1
      %p237 = por %p235, %p236
      %p239 = scmp.ne.s32.totalorder %s224, %s238
      %p240 = scmp.eq.s32.totalorder %s26, 0
      %p241 = por %p239, %p240
      %s243 = sadd.s32 %s242, 1
      %p246 = scmp.eq.s32.totalorder %s20, 1
      %p247 = scmp.ne.s32.totalorder %s242, %s244
      %p248 = scmp.eq.s32.totalorder %s20, 0
      %p249 = por %p247, %p248
      %p250 = scmp.ne.s32.totalorder %s242, %s244
      %p251 = scmp.eq.s32.totalorder %s25, 1
      %p252 = por %p250, %p251
      %p253 = scmp.ne.s32.totalorder %s244, %s245
      %p254 = scmp.eq.s32.totalorder %s25, 0
      %p255 = por %p253, %p254
      %p256 = scmp.ne.s32.totalorder %s244, %s245
      %p257 = scmp.eq.s32.totalorder %s26, 1
      %p258 = por %p256, %p257
      %p260 = scmp.ne.s32.totalorder %s245, %s259
      %p261 = scmp.eq.s32.totalorder %s26, 0
      %p262 = por %p260, %p261
      %p263 = scmp.le.s32.totalorder 1, %s20
      %p264 = scmp.lt.s32.totalorder %s20, 3
      %p265 = pnand %p263, %p264
      %p266 = pneg %p265
      // Predicated region
      $region9: #{projection_head_forward.1} parent=5 // pred_check
        _
      $region10: #{projection_head_forward.1} parent=5 // pred_check_branch
        %268 = sbr.rel (%p265) target = $region12
      $region11: #{projection_head_forward.1} parent=5 // pred_region
        %s269 = ssub.s32 %s20, 1
        // Predicated region
        $region13: #{projection_head_forward.1} parent=11 // pred_check
          %p270 = pneg %p41
        $region14: #{projection_head_forward.1} parent=11 // pred_check_branch
          %272 = sbr.rel (%p270) target = $region16
        $region15: #{projection_head_forward.1} parent=11 // pred_region
          %s274 = ssub.s32 4096, 4096
          %275 = vsyncadd [#allocation4], %s274
          %s276 = sshll.u32 [#allocation3], 4
          %s277 = int_to_ptr.vmem [resolvable:$true] %s276
          %282 = dma.hbm_to_vmem [thread:$0]  %s0, 4096, %s277, [#allocation4], 256, 256, 16
        $region16: #{projection_head_forward.1} parent=11 // pred_fallthru
          _
        // Predicated region
        $region17: #{projection_head_forward.1} parent=11 // pred_check
          %p283 = pneg %p192
        $region18: #{projection_head_forward.1} parent=11 // pred_check_branch
          %285 = sbr.rel (%p283) target = $region20
        $region19: #{projection_head_forward.1} parent=11 // pred_region
          _
        $region20: #{projection_head_forward.1} parent=11 // pred_fallthru
          _
        // Predicated region
        $region21: #{projection_head_forward.1} parent=11 // pred_check
          %p286 = pneg %p213
        $region22: #{projection_head_forward.1} parent=11 // pred_check_branch
          %288 = sbr.rel (%p286) target = $region24
        $region23: #{projection_head_forward.1} parent=11 // pred_region
          _
        $region24: #{projection_head_forward.1} parent=11 // pred_fallthru
          _
        // Predicated region
        $region25: #{projection_head_forward.1} parent=11 // pred_check
          %p289 = pneg %p234
        $region26: #{projection_head_forward.1} parent=11 // pred_check_branch
          %291 = sbr.rel (%p289) target = $region28
        $region27: #{projection_head_forward.1} parent=11 // pred_region
          _
        $region28: #{projection_head_forward.1} parent=11 // pred_fallthru
          _
      $region12: #{projection_head_forward.1} parent=5 // pred_fallthru
        _
      %p292 = scmp.lt.s32.totalorder %s20, 2
      // Predicated region
      $region29: #{projection_head_forward.1} parent=5 // pred_check
        %p293 = pneg %p292
      $region30: #{projection_head_forward.1} parent=5 // pred_check_branch
        %295 = sbr.rel (%p293) target = $region32
      $region31: #{projection_head_forward.1} parent=5 // pred_region
        // Predicated region
        $region33: #{projection_head_forward.1} parent=31 // pred_check
          %p296 = pneg %p61
        $region34: #{projection_head_forward.1} parent=31 // pred_check_branch
          %298 = sbr.rel (%p296) target = $region36
        $region35: #{projection_head_forward.1} parent=31 // pred_region
          %s299 = sand.u32 %s20, 1
          %s300 = scalar_lea.sflag [#allocation7], %s299
          %s301 = sand.u32 %s51, 1
          %s302 = smul.addr %s301, 256
          %s303 = scalar_lea.vmem [#allocation6], %s302
          %s304 = smul.u32 16, %s20
          %s306 = ssub.s32 4096, 4096
          %307 = vsyncadd %s300, %s306
          %s308 = smul.addr %s304, 2
          %s309 = smul.addr %s308, 128
          %s310 = scalar_lea.hbm %s1, %s309
          %s311 = sshll.u32 %s303, 4
          %s312 = int_to_ptr.vmem [resolvable:$true] %s311
          %317 = dma.hbm_to_vmem [thread:$0]  %s310, 4096, %s312, %s300, 256, 256, 16
        $region36: #{projection_head_forward.1} parent=31 // pred_fallthru
          _
        // Predicated region
        $region37: #{projection_head_forward.1} parent=31 // pred_check
          %p318 = pneg %p87
        $region38: #{projection_head_forward.1} parent=31 // pred_check_branch
          %320 = sbr.rel (%p318) target = $region40
        $region39: #{projection_head_forward.1} parent=31 // pred_region
          %p321 = scmp.lt.s32.totalorder %s20, 1
          %s322 = scalar_select %p321, %s20, 1
          %s323 = scalar_lea.vmem %s2, %s322
        $region40: #{projection_head_forward.1} parent=31 // pred_fallthru
          _
        // Predicated region
        $region41: #{projection_head_forward.1} parent=31 // pred_check
          %p324 = pneg %p113
        $region42: #{projection_head_forward.1} parent=31 // pred_check_branch
          %326 = sbr.rel (%p324) target = $region44
        $region43: #{projection_head_forward.1} parent=31 // pred_region
          %p327 = scmp.lt.s32.totalorder %s20, 1
          %s328 = scalar_select %p327, %s20, 1
          %s329 = scalar_lea.vmem %s3, %s328
        $region44: #{projection_head_forward.1} parent=31 // pred_fallthru
          _
        // Predicated region
        $region45: #{projection_head_forward.1} parent=31 // pred_check
          %p330 = pneg %p139
        $region46: #{projection_head_forward.1} parent=31 // pred_check_branch
          %332 = sbr.rel (%p330) target = $region48
        $region47: #{projection_head_forward.1} parent=31 // pred_region
          %p333 = scmp.lt.s32.totalorder %s20, 1
          %s334 = scalar_select %p333, %s20, 1
          %s335 = scalar_lea.vmem %s4, %s334
        $region48: #{projection_head_forward.1} parent=31 // pred_fallthru
          _
        // Predicated region
        $region49: #{projection_head_forward.1} parent=31 // pred_check
          %p336 = pneg %p165
        $region50: #{projection_head_forward.1} parent=31 // pred_check_branch
          %338 = sbr.rel (%p336) target = $region52
        $region51: #{projection_head_forward.1} parent=31 // pred_region
          %s339 = sand.u32 %s20, 1
          %s340 = scalar_lea.sflag [#allocation7], %s339
          %s341 = sand.u32 %s155, 1
          %s342 = smul.addr %s341, 128
          %s343 = scalar_lea.vmem [#allocation8], %s342
          %s345 = ssub.s32 2048, 2048
          %346 = vsyncadd %s340, %s345
          %s347 = smul.addr %s20, 128
          %s348 = scalar_lea.hbm %s5, %s347
          %s349 = sshll.u32 %s343, 4
          %s350 = int_to_ptr.vmem [resolvable:$true] %s349
          %355 = dma.hbm_to_vmem [thread:$0]  %s348, 2048, %s350, %s340, 256, 128, 8
        $region52: #{projection_head_forward.1} parent=31 // pred_fallthru
          _
      $region32: #{projection_head_forward.1} parent=5 // pred_fallthru
        _
      %p356 = scmp.le.s32.totalorder 1, %s20
      %p357 = scmp.lt.s32.totalorder %s20, 3
      %p358 = pnand %p356, %p357
      %p359 = pneg %p358
      // Predicated region
      $region53: #{projection_head_forward.1} parent=5 // pred_check
        _
      $region54: #{projection_head_forward.1} parent=5 // pred_check_branch
        %361 = sbr.rel (%p358) target = $region56
      $region55: #{projection_head_forward.1} parent=5 // pred_region
        %s362 = ssub.s32 %s20, 1
        // Predicated region
        $region57: #{projection_head_forward.1} parent=55 // pred_check
          %p363 = pneg %p41
        $region58: #{projection_head_forward.1} parent=55 // pred_check_branch
          %365 = sbr.rel (%p363) target = $region60
        $region59: #{projection_head_forward.1} parent=55 // pred_region
          %366 = dma.done [#allocation4], 4096
        $region60: #{projection_head_forward.1} parent=55 // pred_fallthru
          _
        %s367 = sand.u32 %s25, 1
        %s368 = scalar_lea.sflag [#allocation7], %s367
        %s369 = sand.u32 %s54, 1
        %s370 = smul.addr %s369, 256
        %s371 = scalar_lea.vmem [#allocation6], %s370
        // Predicated region
        $region61: #{projection_head_forward.1} parent=55 // pred_check
          %p372 = pneg %p67
        $region62: #{projection_head_forward.1} parent=55 // pred_check_branch
          %374 = sbr.rel (%p372) target = $region64
        $region63: #{projection_head_forward.1} parent=55 // pred_region
          %375 = dma.done %s368, 4096
        $region64: #{projection_head_forward.1} parent=55 // pred_fallthru
          _
        %s376 = sand.u32 %s25, 1
        %s377 = scalar_lea.sflag [#allocation7], %s376
        %s378 = sand.u32 %s158, 1
        %s379 = smul.addr %s378, 128
        %s380 = scalar_lea.vmem [#allocation8], %s379
        // Predicated region
        $region65: #{projection_head_forward.1} parent=55 // pred_check
          %p381 = pneg %p171
        $region66: #{projection_head_forward.1} parent=55 // pred_check_branch
          %383 = sbr.rel (%p381) target = $region68
        $region67: #{projection_head_forward.1} parent=55 // pred_region
          %384 = dma.done %s377, 2048
        $region68: #{projection_head_forward.1} parent=55 // pred_fallthru
          _
        %p385 = pneg %p41
        %p386 = pneg %p38
        %s387 = sand.u32 %s25, 1
        %s388 = scalar_lea.sflag [#allocation7], %s387
        %s389 = sand.u32 %s54, 1
        %s390 = smul.addr %s389, 256
        %s391 = scalar_lea.vmem [#allocation6], %s390
        %p392 = pneg %p67
        %p393 = pneg %p64
        %p394 = scmp.lt.s32.totalorder %s25, 1
        %s395 = scalar_select %p394, %s25, 1
        %s396 = scalar_lea.vmem %s2, %s395
        %p397 = pneg %p93
        %p398 = pneg %p90
        %p399 = scmp.lt.s32.totalorder %s25, 1
        %s400 = scalar_select %p399, %s25, 1
        %s401 = scalar_lea.vmem %s3, %s400
        %p402 = pneg %p119
        %p403 = pneg %p116
        %p404 = scmp.lt.s32.totalorder %s25, 1
        %s405 = scalar_select %p404, %s25, 1
        %s406 = scalar_lea.vmem %s4, %s405
        %p407 = pneg %p145
        %p408 = pneg %p142
        %s409 = sand.u32 %s25, 1
        %s410 = scalar_lea.sflag [#allocation7], %s409
        %s411 = sand.u32 %s158, 1
        %s412 = smul.addr %s411, 128
        %s413 = scalar_lea.vmem [#allocation8], %s412
        %p414 = pneg %p171
        %p415 = pneg %p168
        %p416 = pneg %p192
        %p417 = pneg %p189
        %p418 = pneg %p213
        %p419 = pneg %p210
        %p420 = pneg %p234
        %p421 = pneg %p231
        %p422 = pneg %p255
        %p423 = pneg %p252
        %s424 = smul.u32 16, %s25
        %p425 = scmp.lt.s32.totalorder %s25, 1
        %s426 = scalar_select %p425, %s25, 1
        %s427 = scalar_lea.vmem %s2, %s426
        %p428 = scmp.lt.s32.totalorder %s25, 1
        %s429 = scalar_select %p428, %s25, 1
        %s430 = scalar_lea.vmem %s3, %s429
        %p431 = scmp.lt.s32.totalorder %s25, 1
        %s432 = scalar_select %p431, %s25, 1
        %s433 = scalar_lea.vmem %s4, %s432
        %p435 = scmp.eq.s32.totalorder %s25, 0
        // Predicated region
        $region69: #{projection_head_forward.1} parent=55 // pred_check
          %p436 = pneg %p435
        $region70: #{projection_head_forward.1} parent=55 // pred_check_branch
          %438 = sbr.rel (%p436) target = $region72
        $region71: #{projection_head_forward.1} parent=55 // pred_region
          %439 = vst [vmem:[#allocation2] sm:$0xff] 0.0
          %440 = vst [vmem:[#allocation2 + $0x8] sm:$0xff] 0.0
          %441 = vst [vmem:[#allocation2 + $0x10] sm:$0xff] 0.0
          %442 = vst [vmem:[#allocation2 + $0x18] sm:$0xff] 0.0
          %443 = vst [vmem:[#allocation2 + $0x20] sm:$0xff] 0.0
          %444 = vst [vmem:[#allocation2 + $0x28] sm:$0xff] 0.0
          %445 = vst [vmem:[#allocation2 + $0x30] sm:$0xff] 0.0
          %446 = vst [vmem:[#allocation2 + $0x38] sm:$0xff] 0.0
          %447 = vst [vmem:[#allocation2 + $0x40] sm:$0xff] 0.0
          %448 = vst [vmem:[#allocation2 + $0x48] sm:$0xff] 0.0
          %449 = vst [vmem:[#allocation2 + $0x50] sm:$0xff] 0.0
          %450 = vst [vmem:[#allocation2 + $0x58] sm:$0xff] 0.0
          %451 = vst [vmem:[#allocation2 + $0x60] sm:$0xff] 0.0
          %452 = vst [vmem:[#allocation2 + $0x68] sm:$0xff] 0.0
          %453 = vst [vmem:[#allocation2 + $0x70] sm:$0xff] 0.0
          %454 = vst [vmem:[#allocation2 + $0x78] sm:$0xff] 0.0
        $region72: #{projection_head_forward.1} parent=55 // pred_fallthru
          _
        %v455 = vld [vmem:[#allocation3] sm:$0xff]
        %v456 = vld [vmem:[#allocation3 + $0x8] sm:$0xff]
        %v457 = vld [vmem:[#allocation3 + $0x10] sm:$0xff]
        %v458 = vld [vmem:[#allocation3 + $0x18] sm:$0xff]
        %v459 = vld [vmem:[#allocation3 + $0x20] sm:$0xff]
        %v460 = vld [vmem:[#allocation3 + $0x28] sm:$0xff]
        %v461 = vld [vmem:[#allocation3 + $0x30] sm:$0xff]
        %v462 = vld [vmem:[#allocation3 + $0x38] sm:$0xff]
        %v463 = vld [vmem:[#allocation3 + $0x40] sm:$0xff]
        %v464 = vld [vmem:[#allocation3 + $0x48] sm:$0xff]
        %v465 = vld [vmem:[#allocation3 + $0x50] sm:$0xff]
        %v466 = vld [vmem:[#allocation3 + $0x58] sm:$0xff]
        %v467 = vld [vmem:[#allocation3 + $0x60] sm:$0xff]
        %v468 = vld [vmem:[#allocation3 + $0x68] sm:$0xff]
        %v469 = vld [vmem:[#allocation3 + $0x70] sm:$0xff]
        %v470 = vld [vmem:[#allocation3 + $0x78] sm:$0xff]
        %v471 = vld [vmem:[#allocation3 + $0x80] sm:$0xff]
        %v472 = vld [vmem:[#allocation3 + $0x88] sm:$0xff]
        %v473 = vld [vmem:[#allocation3 + $0x90] sm:$0xff]
        %v474 = vld [vmem:[#allocation3 + $0x98] sm:$0xff]
        %v475 = vld [vmem:[#allocation3 + $0xa0] sm:$0xff]
        %v476 = vld [vmem:[#allocation3 + $0xa8] sm:$0xff]
        %v477 = vld [vmem:[#allocation3 + $0xb0] sm:$0xff]
        %v478 = vld [vmem:[#allocation3 + $0xb8] sm:$0xff]
        %v479 = vld [vmem:[#allocation3 + $0xc0] sm:$0xff]
        %v480 = vld [vmem:[#allocation3 + $0xc8] sm:$0xff]
        %v481 = vld [vmem:[#allocation3 + $0xd0] sm:$0xff]
        %v482 = vld [vmem:[#allocation3 + $0xd8] sm:$0xff]
        %v483 = vld [vmem:[#allocation3 + $0xe0] sm:$0xff]
        %v484 = vld [vmem:[#allocation3 + $0xe8] sm:$0xff]
        %v485 = vld [vmem:[#allocation3 + $0xf0] sm:$0xff]
        %v486 = vld [vmem:[#allocation3 + $0xf8] sm:$0xff]
        %v487 = vpack.c.bf16 %v457, %v455
        %v488 = vpack.c.bf16 %v458, %v456
        %v489 = vpack.c.bf16 %v461, %v459
        %v490 = vpack.c.bf16 %v462, %v460
        %v491 = vpack.c.bf16 %v465, %v463
        %v492 = vpack.c.bf16 %v466, %v464
        %v493 = vpack.c.bf16 %v469, %v467
        %v494 = vpack.c.bf16 %v470, %v468
        %v495 = vpack.c.bf16 %v473, %v471
        %v496 = vpack.c.bf16 %v474, %v472
        %v497 = vpack.c.bf16 %v477, %v475
        %v498 = vpack.c.bf16 %v478, %v476
        %v499 = vpack.c.bf16 %v481, %v479
        %v500 = vpack.c.bf16 %v482, %v480
        %v501 = vpack.c.bf16 %v485, %v483
        %v502 = vpack.c.bf16 %v486, %v484
        %v503 = vld [vmem:[%s371] sm:$0xff]
        %v504 = vld [vmem:[%s371 + $0x8] sm:$0xff]
        %v505 = vld [vmem:[%s371 + $0x10] sm:$0xff]
        %v506 = vld [vmem:[%s371 + $0x18] sm:$0xff]
        %v507 = vld [vmem:[%s371 + $0x20] sm:$0xff]
        %v508 = vld [vmem:[%s371 + $0x28] sm:$0xff]
        %v509 = vld [vmem:[%s371 + $0x30] sm:$0xff]
        %v510 = vld [vmem:[%s371 + $0x38] sm:$0xff]
        %v511 = vld [vmem:[%s371 + $0x40] sm:$0xff]
        %v512 = vld [vmem:[%s371 + $0x48] sm:$0xff]
        %v513 = vld [vmem:[%s371 + $0x50] sm:$0xff]
        %v514 = vld [vmem:[%s371 + $0x58] sm:$0xff]
        %v515 = vld [vmem:[%s371 + $0x60] sm:$0xff]
        %v516 = vld [vmem:[%s371 + $0x68] sm:$0xff]
        %v517 = vld [vmem:[%s371 + $0x70] sm:$0xff]
        %v518 = vld [vmem:[%s371 + $0x78] sm:$0xff]
        %v519 = vld [vmem:[%s371 + $0x80] sm:$0xff]
        %v520 = vld [vmem:[%s371 + $0x88] sm:$0xff]
        %v521 = vld [vmem:[%s371 + $0x90] sm:$0xff]
        %v522 = vld [vmem:[%s371 + $0x98] sm:$0xff]
        %v523 = vld [vmem:[%s371 + $0xa0] sm:$0xff]
        %v524 = vld [vmem:[%s371 + $0xa8] sm:$0xff]
        %v525 = vld [vmem:[%s371 + $0xb0] sm:$0xff]
        %v526 = vld [vmem:[%s371 + $0xb8] sm:$0xff]
        %v527 = vld [vmem:[%s371 + $0xc0] sm:$0xff]
        %v528 = vld [vmem:[%s371 + $0xc8] sm:$0xff]
        %v529 = vld [vmem:[%s371 + $0xd0] sm:$0xff]
        %v530 = vld [vmem:[%s371 + $0xd8] sm:$0xff]
        %v531 = vld [vmem:[%s371 + $0xe0] sm:$0xff]
        %v532 = vld [vmem:[%s371 + $0xe8] sm:$0xff]
        %v533 = vld [vmem:[%s371 + $0xf0] sm:$0xff]
        %v534 = vld [vmem:[%s371 + $0xf8] sm:$0xff]
        %v535 = vpack.c.bf16 %v505, %v503
        %v536 = vpack.c.bf16 %v506, %v504
        %v537 = vpack.c.bf16 %v509, %v507
        %v538 = vpack.c.bf16 %v510, %v508
        %v539 = vpack.c.bf16 %v513, %v511
        %v540 = vpack.c.bf16 %v514, %v512
        %v541 = vpack.c.bf16 %v517, %v515
        %v542 = vpack.c.bf16 %v518, %v516
        %v543 = vpack.c.bf16 %v521, %v519
        %v544 = vpack.c.bf16 %v522, %v520
        %v545 = vpack.c.bf16 %v525, %v523
        %v546 = vpack.c.bf16 %v526, %v524
        %v547 = vpack.c.bf16 %v529, %v527
        %v548 = vpack.c.bf16 %v530, %v528
        %v549 = vpack.c.bf16 %v533, %v531
        %v550 = vpack.c.bf16 %v534, %v532
        %v551 = vld [vmem:[%s427] sm:$0x1]
        %v553 = vlaneseq
        %v554 = vshrl.u32 %v553, 7
        %v555 = vsub.s32 0, %v554
        %v556 = vrot.slane %v551, %v555
        %558 = vmatprep.subr.bf16.mxu0 %v536
        %559 = vmatpush1.bf16.xpose.msra.mxu0 %v535
        %560 = vmatprep.subr.bf16.mxu0 %v538
        %561 = vmatpush1.bf16.xpose.msra.mxu0 %v537
        %562 = vmatprep.subr.bf16.mxu0 %v540
        %563 = vmatpush1.bf16.xpose.msra.mxu0 %v539
        %564 = vmatprep.subr.bf16.mxu0 %v542
        %565 = vmatpush1.bf16.xpose.msra.mxu0 %v541
        %566 = vmatprep.subr.bf16.mxu0 %v544
        %567 = vmatpush1.bf16.xpose.msra.mxu0 %v543
        %568 = vmatprep.subr.bf16.mxu0 %v546
        %569 = vmatpush1.bf16.xpose.msra.mxu0 %v545
        %570 = vmatprep.subr.bf16.mxu0 %v548
        %571 = vmatpush1.bf16.xpose.msra.mxu0 %v547
        %572 = vmatprep.subr.bf16.mxu0 %v550
        %573 = vmatpush1.bf16.xpose.msra.mxu0 %v549
        %574 = vmatprep.subr.bf16.mxu0 0
        %575 = vmatpush1.bf16.xpose.msra.mxu0 0
        %576 = vmatprep.subr.bf16.mxu0 0
        %577 = vmatpush1.bf16.xpose.msra.mxu0 0
        %578 = vmatprep.subr.bf16.mxu0 0
        %579 = vmatpush1.bf16.xpose.msra.mxu0 0
        %580 = vmatprep.subr.bf16.mxu0 0
        %581 = vmatpush1.bf16.xpose.msra.mxu0 0
        %582 = vmatprep.subr.bf16.mxu0 0
        %583 = vmatpush1.bf16.xpose.msra.mxu0 0
        %584 = vmatprep.subr.bf16.mxu0 0
        %585 = vmatpush1.bf16.xpose.msra.mxu0 0
        %586 = vmatprep.subr.bf16.mxu0 0
        %587 = vmatpush1.bf16.xpose.msra.mxu0 0
        %588 = vmatprep.subr.bf16.mxu0 0
        %589 = vmatpush1.bf16.xpose.msra.mxu0 0
        %590 = vmatprep.mubr.bf16.mxu0 %v488
        %591 = vmatmul.mubr.bf16.gmra.mrb[0].mxu0 %v487
        %v592 = vpop.f32.mrb[0].mxu0
        %v593 = vadd.f32 %v556, %v592
        %v594 = vpop.f32.mrb[0].mxu0
        %v595 = vpop.f32.mrb[0].mxu0
        %v596 = vadd.f32 %v556, %v595
        %v597 = vpop.f32.mrb[0].mxu0
        %598 = vmatprep.mubr.bf16.mxu0 %v490
        %599 = vmatmul.mubr.bf16.gmra.mrb[0].mxu0 %v489
        %v600 = vpop.f32.mrb[0].mxu0
        %v601 = vadd.f32 %v556, %v600
        %v602 = vpop.f32.mrb[0].mxu0
        %v603 = vpop.f32.mrb[0].mxu0
        %v604 = vadd.f32 %v556, %v603
        %v605 = vpop.f32.mrb[0].mxu0
        %606 = vmatprep.mubr.bf16.mxu0 %v492
        %607 = vmatmul.mubr.bf16.gmra.mrb[0].mxu0 %v491
        %v608 = vpop.f32.mrb[0].mxu0
        %v609 = vadd.f32 %v556, %v608
        %v610 = vpop.f32.mrb[0].mxu0
        %v611 = vpop.f32.mrb[0].mxu0
        %v612 = vadd.f32 %v556, %v611
        %v613 = vpop.f32.mrb[0].mxu0
        %614 = vmatprep.mubr.bf16.mxu0 %v494
        %615 = vmatmul.mubr.bf16.gmra.mrb[0].mxu0 %v493
        %v616 = vpop.f32.mrb[0].mxu0
        %v617 = vadd.f32 %v556, %v616
        %v618 = vpop.f32.mrb[0].mxu0
        %v619 = vpop.f32.mrb[0].mxu0
        %v620 = vadd.f32 %v556, %v619
        %v621 = vpop.f32.mrb[0].mxu0
        %622 = vmatprep.mubr.bf16.mxu0 %v496
        %623 = vmatmul.mubr.bf16.gmra.mrb[0].mxu0 %v495
        %v624 = vpop.f32.mrb[0].mxu0
        %v625 = vadd.f32 %v556, %v624
        %v626 = vpop.f32.mrb[0].mxu0
        %v627 = vpop.f32.mrb[0].mxu0
        %v628 = vadd.f32 %v556, %v627
        %v629 = vpop.f32.mrb[0].mxu0
        %630 = vmatprep.mubr.bf16.mxu0 %v498
        %631 = vmatmul.mubr.bf16.gmra.mrb[0].mxu0 %v497
        %v632 = vpop.f32.mrb[0].mxu0
        %v633 = vadd.f32 %v556, %v632
        %v634 = vpop.f32.mrb[0].mxu0
        %v635 = vpop.f32.mrb[0].mxu0
        %v636 = vadd.f32 %v556, %v635
        %v637 = vpop.f32.mrb[0].mxu0
        %638 = vmatprep.mubr.bf16.mxu0 %v500
        %639 = vmatmul.mubr.bf16.gmra.mrb[0].mxu0 %v499
        %v640 = vpop.f32.mrb[0].mxu0
        %v641 = vadd.f32 %v556, %v640
        %v642 = vpop.f32.mrb[0].mxu0
        %v643 = vpop.f32.mrb[0].mxu0
        %v644 = vadd.f32 %v556, %v643
        %v645 = vpop.f32.mrb[0].mxu0
        %646 = vmatprep.mubr.bf16.mxu0 %v502
        %647 = vmatmul.mubr.bf16.gmra.mrb[0].mxu0 %v501
        %v648 = vpop.f32.mrb[0].mxu0
        %v649 = vadd.f32 %v556, %v648
        %v650 = vpop.f32.mrb[0].mxu0
        %v651 = vpop.f32.mrb[0].mxu0
        %v652 = vadd.f32 %v556, %v651
        %v653 = vpop.f32.mrb[0].mxu0
        %654 = vdwg.mxu0
        %v655 = vadd.f32 %v593, %v596
        %v656 = vadd.f32 %v655, %v601
        %v657 = vadd.f32 %v656, %v604
        %v658 = vadd.f32 %v657, %v609
        %v659 = vadd.f32 %v658, %v612
        %v660 = vadd.f32 %v659, %v617
        %v661 = vadd.f32 %v660, %v620
        %v662 = vadd.f32 %v661, %v625
        %v663 = vadd.f32 %v662, %v628
        %v664 = vadd.f32 %v663, %v633
        %v665 = vadd.f32 %v664, %v636
        %v666 = vadd.f32 %v665, %v641
        %v667 = vadd.f32 %v666, %v644
        %v668 = vadd.f32 %v667, %v649
        %v669 = vadd.f32 %v668, %v652
        %v670 = vrot.slane %v669, 4
        %v671 = vadd.f32 %v669, %v670
        %v672 = vrot.slane %v671, 2
        %v673 = vadd.f32 %v671, %v672
        %v674 = vrot.slane %v673, 1
        %v675 = vadd.f32 %v673, %v674
        %v676 = vrcp.pop 128.0
        %v677 = vmul.f32 %v675, %v676
        %v678 = vsub.f32 %v593, %v677
        %v679 = vsub.f32 %v596, %v677
        %v680 = vsub.f32 %v601, %v677
        %v681 = vsub.f32 %v604, %v677
        %v682 = vsub.f32 %v609, %v677
        %v683 = vsub.f32 %v612, %v677
        %v684 = vsub.f32 %v617, %v677
        %v685 = vsub.f32 %v620, %v677
        %v686 = vsub.f32 %v625, %v677
        %v687 = vsub.f32 %v628, %v677
        %v688 = vsub.f32 %v633, %v677
        %v689 = vsub.f32 %v636, %v677
        %v690 = vsub.f32 %v641, %v677
        %v691 = vsub.f32 %v644, %v677
        %v692 = vsub.f32 %v649, %v677
        %v693 = vsub.f32 %v652, %v677
        %v694 = vmul.f32 %v678, %v678
        %v695 = vmul.f32 %v679, %v679
        %v696 = vmul.f32 %v680, %v680
        %v697 = vmul.f32 %v681, %v681
        %v698 = vmul.f32 %v682, %v682
        %v699 = vmul.f32 %v683, %v683
        %v700 = vmul.f32 %v684, %v684
        %v701 = vmul.f32 %v685, %v685
        %v702 = vmul.f32 %v686, %v686
        %v703 = vmul.f32 %v687, %v687
        %v704 = vmul.f32 %v688, %v688
        %v705 = vmul.f32 %v689, %v689
        %v706 = vmul.f32 %v690, %v690
        %v707 = vmul.f32 %v691, %v691
        %v708 = vmul.f32 %v692, %v692
        %v709 = vmul.f32 %v693, %v693
        %v710 = vadd.f32 %v694, %v695
        %v711 = vadd.f32 %v710, %v696
        %v712 = vadd.f32 %v711, %v697
        %v713 = vadd.f32 %v712, %v698
        %v714 = vadd.f32 %v713, %v699
        %v715 = vadd.f32 %v714, %v700
        %v716 = vadd.f32 %v715, %v701
        %v717 = vadd.f32 %v716, %v702
        %v718 = vadd.f32 %v717, %v703
        %v719 = vadd.f32 %v718, %v704
        %v720 = vadd.f32 %v719, %v705
        %v721 = vadd.f32 %v720, %v706
        %v722 = vadd.f32 %v721, %v707
        %v723 = vadd.f32 %v722, %v708
        %v724 = vadd.f32 %v723, %v709
        %v725 = vrot.slane %v724, 4
        %v726 = vadd.f32 %v724, %v725
        %v727 = vrot.slane %v726, 2
        %v728 = vadd.f32 %v726, %v727
        %v729 = vrot.slane %v728, 1
        %v730 = vadd.f32 %v728, %v729
        %v731 = vmul.f32 %v730, %v676
        %v732 = vld [vmem:[%s430] sm:$0x1]
        %v733 = vadd.f32 %v731, 1e-05
        %v734 = vrsqrt.pop %v733
        %v735 = vmul.f32 %v732, %v734
        %v737 = vlaneseq
        %v738 = vshrl.u32 %v737, 7
        %v739 = vsub.s32 0, %v738
        %v740 = vrot.slane %v735, %v739
        %v742 = vmul.f32 %v678, %v740
        %v743 = vmul.f32 %v679, %v740
        %v744 = vmul.f32 %v680, %v740
        %v745 = vmul.f32 %v681, %v740
        %v746 = vmul.f32 %v682, %v740
        %v747 = vmul.f32 %v683, %v740
        %v748 = vmul.f32 %v684, %v740
        %v749 = vmul.f32 %v685, %v740
        %v750 = vmul.f32 %v686, %v740
        %v751 = vmul.f32 %v687, %v740
        %v752 = vmul.f32 %v688, %v740
        %v753 = vmul.f32 %v689, %v740
        %v754 = vmul.f32 %v690, %v740
        %v755 = vmul.f32 %v691, %v740
        %v756 = vmul.f32 %v692, %v740
        %v757 = vmul.f32 %v693, %v740
        %v758 = vld [vmem:[%s433] sm:$0x1]
        %v760 = vlaneseq
        %v761 = vshrl.u32 %v760, 7
        %v762 = vsub.s32 0, %v761
        %v763 = vrot.slane %v758, %v762
        %v765 = vadd.f32 %v742, %v763
        %v766 = vadd.f32 %v743, %v763
        %v767 = vadd.f32 %v744, %v763
        %v768 = vadd.f32 %v745, %v763
        %v769 = vadd.f32 %v746, %v763
        %v770 = vadd.f32 %v747, %v763
        %v771 = vadd.f32 %v748, %v763
        %v772 = vadd.f32 %v749, %v763
        %v773 = vadd.f32 %v750, %v763
        %v774 = vadd.f32 %v751, %v763
        %v775 = vadd.f32 %v752, %v763
        %v776 = vadd.f32 %v753, %v763
        %v777 = vadd.f32 %v754, %v763
        %v778 = vadd.f32 %v755, %v763
        %v779 = vadd.f32 %v756, %v763
        %v780 = vadd.f32 %v757, %v763
        %v781 = vmax.f32 %v765, 0.0
        %v782 = vmax.f32 %v766, 0.0
        %v783 = vmax.f32 %v767, 0.0
        %v784 = vmax.f32 %v768, 0.0
        %v785 = vmax.f32 %v769, 0.0
        %v786 = vmax.f32 %v770, 0.0
        %v787 = vmax.f32 %v771, 0.0
        %v788 = vmax.f32 %v772, 0.0
        %v789 = vmax.f32 %v773, 0.0
        %v790 = vmax.f32 %v774, 0.0
        %v791 = vmax.f32 %v775, 0.0
        %v792 = vmax.f32 %v776, 0.0
        %v793 = vmax.f32 %v777, 0.0
        %v794 = vmax.f32 %v778, 0.0
        %v795 = vmax.f32 %v779, 0.0
        %v796 = vmax.f32 %v780, 0.0
        %v797 = vpack.c.bf16 %v782, %v781
        %v798 = vpack.c.bf16 %v784, %v783
        %v799 = vpack.c.bf16 %v786, %v785
        %v800 = vpack.c.bf16 %v788, %v787
        %v801 = vpack.c.bf16 %v790, %v789
        %v802 = vpack.c.bf16 %v792, %v791
        %v803 = vpack.c.bf16 %v794, %v793
        %v804 = vpack.c.bf16 %v796, %v795
        %v805 = vld [vmem:[%s380] sm:$0xff]
        %v806 = vld [vmem:[%s380 + $0x8] sm:$0xff]
        %v807 = vld [vmem:[%s380 + $0x10] sm:$0xff]
        %v808 = vld [vmem:[%s380 + $0x18] sm:$0xff]
        %v809 = vld [vmem:[%s380 + $0x20] sm:$0xff]
        %v810 = vld [vmem:[%s380 + $0x28] sm:$0xff]
        %v811 = vld [vmem:[%s380 + $0x30] sm:$0xff]
        %v812 = vld [vmem:[%s380 + $0x38] sm:$0xff]
        %v813 = vld [vmem:[%s380 + $0x40] sm:$0xff]
        %v814 = vld [vmem:[%s380 + $0x48] sm:$0xff]
        %v815 = vld [vmem:[%s380 + $0x50] sm:$0xff]
        %v816 = vld [vmem:[%s380 + $0x58] sm:$0xff]
        %v817 = vld [vmem:[%s380 + $0x60] sm:$0xff]
        %v818 = vld [vmem:[%s380 + $0x68] sm:$0xff]
        %v819 = vld [vmem:[%s380 + $0x70] sm:$0xff]
        %v820 = vld [vmem:[%s380 + $0x78] sm:$0xff]
        %v821 = vpack.c.bf16 %v806, %v805
        %v822 = vpack.c.bf16 %v808, %v807
        %v823 = vpack.c.bf16 %v810, %v809
        %v824 = vpack.c.bf16 %v812, %v811
        %v825 = vpack.c.bf16 %v814, %v813
        %v826 = vpack.c.bf16 %v816, %v815
        %v827 = vpack.c.bf16 %v818, %v817
        %v828 = vpack.c.bf16 %v820, %v819
        %v829 = vld [vmem:[#allocation2] sm:$0xff]
        %v830 = vld [vmem:[#allocation2 + $0x8] sm:$0xff]
        %v831 = vld [vmem:[#allocation2 + $0x10] sm:$0xff]
        %v832 = vld [vmem:[#allocation2 + $0x18] sm:$0xff]
        %v833 = vld [vmem:[#allocation2 + $0x20] sm:$0xff]
        %v834 = vld [vmem:[#allocation2 + $0x28] sm:$0xff]
        %v835 = vld [vmem:[#allocation2 + $0x30] sm:$0xff]
        %v836 = vld [vmem:[#allocation2 + $0x38] sm:$0xff]
        %v837 = vld [vmem:[#allocation2 + $0x40] sm:$0xff]
        %v838 = vld [vmem:[#allocation2 + $0x48] sm:$0xff]
        %v839 = vld [vmem:[#allocation2 + $0x50] sm:$0xff]
        %v840 = vld [vmem:[#allocation2 + $0x58] sm:$0xff]
        %v841 = vld [vmem:[#allocation2 + $0x60] sm:$0xff]
        %v842 = vld [vmem:[#allocation2 + $0x68] sm:$0xff]
        %v843 = vld [vmem:[#allocation2 + $0x70] sm:$0xff]
        %v844 = vld [vmem:[#allocation2 + $0x78] sm:$0xff]
        %845 = vmatprep.subr.bf16.mxu0 0
        %846 = vmatpush1.bf16.xpose.msra.mxu0 %v821
        %847 = vmatprep.subr.bf16.mxu0 0
        %848 = vmatpush1.bf16.xpose.msra.mxu0 %v822
        %849 = vmatprep.subr.bf16.mxu0 0
        %850 = vmatpush1.bf16.xpose.msra.mxu0 %v823
        %851 = vmatprep.subr.bf16.mxu0 0
        %852 = vmatpush1.bf16.xpose.msra.mxu0 %v824
        %853 = vmatprep.subr.bf16.mxu0 0
        %854 = vmatpush1.bf16.xpose.msra.mxu0 %v825
        %855 = vmatprep.subr.bf16.mxu0 0
        %856 = vmatpush1.bf16.xpose.msra.mxu0 %v826
        %857 = vmatprep.subr.bf16.mxu0 0
        %858 = vmatpush1.bf16.xpose.msra.mxu0 %v827
        %859 = vmatprep.subr.bf16.mxu0 0
        %860 = vmatpush1.bf16.xpose.msra.mxu0 %v828
        %861 = vmatprep.subr.bf16.mxu0 0
        %862 = vmatpush1.bf16.xpose.msra.mxu0 0
        %863 = vmatprep.subr.bf16.mxu0 0
        %864 = vmatpush1.bf16.xpose.msra.mxu0 0
        %865 = vmatprep.subr.bf16.mxu0 0
        %866 = vmatpush1.bf16.xpose.msra.mxu0 0
        %867 = vmatprep.subr.bf16.mxu0 0
        %868 = vmatpush1.bf16.xpose.msra.mxu0 0
        %869 = vmatprep.subr.bf16.mxu0 0
        %870 = vmatpush1.bf16.xpose.msra.mxu0 0
        %871 = vmatprep.subr.bf16.mxu0 0
        %872 = vmatpush1.bf16.xpose.msra.mxu0 0
        %873 = vmatprep.subr.bf16.mxu0 0
        %874 = vmatpush1.bf16.xpose.msra.mxu0 0
        %875 = vmatprep.subr.bf16.mxu0 0
        %876 = vmatpush1.bf16.xpose.msra.mxu0 0
        %877 = vmatprep.mubr.bf16.mxu0 0
        %878 = vmatmul.mubr.bf16.gmra.mrb[0].mxu0 %v797
        %v879 = vpop.f32.mrb[0].mxu0
        %v880 = vadd.f32 0.0, %v879
        %v881 = vpop.f32.mrb[0].mxu0
        %v882 = vpop.f32.mrb[0].mxu0
        %v883 = vadd.f32 0.0, %v882
        %v884 = vpop.f32.mrb[0].mxu0
        %885 = vmatprep.mubr.bf16.mxu0 0
        %886 = vmatmul.mubr.bf16.gmra.mrb[0].mxu0 %v798
        %v887 = vpop.f32.mrb[0].mxu0
        %v888 = vadd.f32 0.0, %v887
        %v889 = vpop.f32.mrb[0].mxu0
        %v890 = vpop.f32.mrb[0].mxu0
        %v891 = vadd.f32 0.0, %v890
        %v892 = vpop.f32.mrb[0].mxu0
        %893 = vmatprep.mubr.bf16.mxu0 0
        %894 = vmatmul.mubr.bf16.gmra.mrb[0].mxu0 %v799
        %v895 = vpop.f32.mrb[0].mxu0
        %v896 = vadd.f32 0.0, %v895
        %v897 = vpop.f32.mrb[0].mxu0
        %v898 = vpop.f32.mrb[0].mxu0
        %v899 = vadd.f32 0.0, %v898
        %v900 = vpop.f32.mrb[0].mxu0
        %901 = vmatprep.mubr.bf16.mxu0 0
        %902 = vmatmul.mubr.bf16.gmra.mrb[0].mxu0 %v800
        %v903 = vpop.f32.mrb[0].mxu0
        %v904 = vadd.f32 0.0, %v903
        %v905 = vpop.f32.mrb[0].mxu0
        %v906 = vpop.f32.mrb[0].mxu0
        %v907 = vadd.f32 0.0, %v906
        %v908 = vpop.f32.mrb[0].mxu0
        %909 = vmatprep.mubr.bf16.mxu0 0
        %910 = vmatmul.mubr.bf16.gmra.mrb[0].mxu0 %v801
        %v911 = vpop.f32.mrb[0].mxu0
        %v912 = vadd.f32 0.0, %v911
        %v913 = vpop.f32.mrb[0].mxu0
        %v914 = vpop.f32.mrb[0].mxu0
        %v915 = vadd.f32 0.0, %v914
        %v916 = vpop.f32.mrb[0].mxu0
        %917 = vmatprep.mubr.bf16.mxu0 0
        %918 = vmatmul.mubr.bf16.gmra.mrb[0].mxu0 %v802
        %v919 = vpop.f32.mrb[0].mxu0
        %v920 = vadd.f32 0.0, %v919
        %v921 = vpop.f32.mrb[0].mxu0
        %v922 = vpop.f32.mrb[0].mxu0
        %v923 = vadd.f32 0.0, %v922
        %v924 = vpop.f32.mrb[0].mxu0
        %925 = vmatprep.mubr.bf16.mxu0 0
        %926 = vmatmul.mubr.bf16.gmra.mrb[0].mxu0 %v803
        %v927 = vpop.f32.mrb[0].mxu0
        %v928 = vadd.f32 0.0, %v927
        %v929 = vpop.f32.mrb[0].mxu0
        %v930 = vpop.f32.mrb[0].mxu0
        %v931 = vadd.f32 0.0, %v930
        %v932 = vpop.f32.mrb[0].mxu0
        %933 = vmatprep.mubr.bf16.mxu0 0
        %934 = vmatmul.mubr.bf16.gmra.mrb[0].mxu0 %v804
        %v935 = vpop.f32.mrb[0].mxu0
        %v936 = vadd.f32 0.0, %v935
        %v937 = vpop.f32.mrb[0].mxu0
        %v938 = vpop.f32.mrb[0].mxu0
        %v939 = vadd.f32 0.0, %v938
        %v940 = vpop.f32.mrb[0].mxu0
        %941 = vdwg.mxu0
        %v942 = vadd.f32 %v829, %v880
        %v943 = vadd.f32 %v830, %v883
        %v944 = vadd.f32 %v831, %v888
        %v945 = vadd.f32 %v832, %v891
        %v946 = vadd.f32 %v833, %v896
        %v947 = vadd.f32 %v834, %v899
        %v948 = vadd.f32 %v835, %v904
        %v949 = vadd.f32 %v836, %v907
        %v950 = vadd.f32 %v837, %v912
        %v951 = vadd.f32 %v838, %v915
        %v952 = vadd.f32 %v839, %v920
        %v953 = vadd.f32 %v840, %v923
        %v954 = vadd.f32 %v841, %v928
        %v955 = vadd.f32 %v842, %v931
        %v956 = vadd.f32 %v843, %v936
        %v957 = vadd.f32 %v844, %v939
        %958 = vst [vmem:[#allocation2] sm:$0xff] %v942
        %959 = vst [vmem:[#allocation2 + $0x8] sm:$0xff] %v943
        %960 = vst [vmem:[#allocation2 + $0x10] sm:$0xff] %v944
        %961 = vst [vmem:[#allocation2 + $0x18] sm:$0xff] %v945
        %962 = vst [vmem:[#allocation2 + $0x20] sm:$0xff] %v946
        %963 = vst [vmem:[#allocation2 + $0x28] sm:$0xff] %v947
        %964 = vst [vmem:[#allocation2 + $0x30] sm:$0xff] %v948
        %965 = vst [vmem:[#allocation2 + $0x38] sm:$0xff] %v949
        %966 = vst [vmem:[#allocation2 + $0x40] sm:$0xff] %v950
        %967 = vst [vmem:[#allocation2 + $0x48] sm:$0xff] %v951
        %968 = vst [vmem:[#allocation2 + $0x50] sm:$0xff] %v952
        %969 = vst [vmem:[#allocation2 + $0x58] sm:$0xff] %v953
        %970 = vst [vmem:[#allocation2 + $0x60] sm:$0xff] %v954
        %971 = vst [vmem:[#allocation2 + $0x68] sm:$0xff] %v955
        %972 = vst [vmem:[#allocation2 + $0x70] sm:$0xff] %v956
        %973 = vst [vmem:[#allocation2 + $0x78] sm:$0xff] %v957
        %p974 = scmp.eq.s32.totalorder %s25, 1
        // Predicated region
        $region73: #{projection_head_forward.1} parent=55 // pred_check
          %p975 = pneg %p974
        $region74: #{projection_head_forward.1} parent=55 // pred_check_branch
          %977 = sbr.rel (%p975) target = $region76
        $region75: #{projection_head_forward.1} parent=55 // pred_region
          %v978 = vld [vmem:[#allocation2] sm:$0xff]
          %v979 = vld [vmem:[#allocation2 + $0x8] sm:$0xff]
          %v980 = vld [vmem:[#allocation2 + $0x10] sm:$0xff]
          %v981 = vld [vmem:[#allocation2 + $0x18] sm:$0xff]
          %v982 = vld [vmem:[#allocation2 + $0x20] sm:$0xff]
          %v983 = vld [vmem:[#allocation2 + $0x28] sm:$0xff]
          %v984 = vld [vmem:[#allocation2 + $0x30] sm:$0xff]
          %v985 = vld [vmem:[#allocation2 + $0x38] sm:$0xff]
          %v986 = vld [vmem:[#allocation2 + $0x40] sm:$0xff]
          %v987 = vld [vmem:[#allocation2 + $0x48] sm:$0xff]
          %v988 = vld [vmem:[#allocation2 + $0x50] sm:$0xff]
          %v989 = vld [vmem:[#allocation2 + $0x58] sm:$0xff]
          %v990 = vld [vmem:[#allocation2 + $0x60] sm:$0xff]
          %v991 = vld [vmem:[#allocation2 + $0x68] sm:$0xff]
          %v992 = vld [vmem:[#allocation2 + $0x70] sm:$0xff]
          %v993 = vld [vmem:[#allocation2 + $0x78] sm:$0xff]
          %v994 = vld [vmem:[%s6] sm:$0x1]
          %v996 = vlaneseq
          %v997 = vshrl.u32 %v996, 7
          %v998 = vsub.s32 0, %v997
          %v999 = vrot.slane %v994, %v998
          %v1001 = vadd.f32 %v978, %v999
          %v1002 = vadd.f32 %v979, %v999
          %v1003 = vadd.f32 %v980, %v999
          %v1004 = vadd.f32 %v981, %v999
          %v1005 = vadd.f32 %v982, %v999
          %v1006 = vadd.f32 %v983, %v999
          %v1007 = vadd.f32 %v984, %v999
          %v1008 = vadd.f32 %v985, %v999
          %v1009 = vadd.f32 %v986, %v999
          %v1010 = vadd.f32 %v987, %v999
          %v1011 = vadd.f32 %v988, %v999
          %v1012 = vadd.f32 %v989, %v999
          %v1013 = vadd.f32 %v990, %v999
          %v1014 = vadd.f32 %v991, %v999
          %v1015 = vadd.f32 %v992, %v999
          %v1016 = vadd.f32 %v993, %v999
          %v1017 = vadd.f32 %v1001, %v1002
          %v1018 = vadd.f32 %v1017, %v1003
          %v1019 = vadd.f32 %v1018, %v1004
          %v1020 = vadd.f32 %v1019, %v1005
          %v1021 = vadd.f32 %v1020, %v1006
          %v1022 = vadd.f32 %v1021, %v1007
          %v1023 = vadd.f32 %v1022, %v1008
          %v1024 = vadd.f32 %v1023, %v1009
          %v1025 = vadd.f32 %v1024, %v1010
          %v1026 = vadd.f32 %v1025, %v1011
          %v1027 = vadd.f32 %v1026, %v1012
          %v1028 = vadd.f32 %v1027, %v1013
          %v1029 = vadd.f32 %v1028, %v1014
          %v1030 = vadd.f32 %v1029, %v1015
          %v1031 = vadd.f32 %v1030, %v1016
          %v1032 = vrot.slane %v1031, 4
          %v1033 = vadd.f32 %v1031, %v1032
          %v1034 = vrot.slane %v1033, 2
          %v1035 = vadd.f32 %v1033, %v1034
          %v1036 = vrot.slane %v1035, 1
          %v1037 = vadd.f32 %v1035, %v1036
          %v1038 = vmul.f32 %v1037, %v676
          %v1039 = vsub.f32 %v1001, %v1038
          %v1040 = vsub.f32 %v1002, %v1038
          %v1041 = vsub.f32 %v1003, %v1038
          %v1042 = vsub.f32 %v1004, %v1038
          %v1043 = vsub.f32 %v1005, %v1038
          %v1044 = vsub.f32 %v1006, %v1038
          %v1045 = vsub.f32 %v1007, %v1038
          %v1046 = vsub.f32 %v1008, %v1038
          %v1047 = vsub.f32 %v1009, %v1038
          %v1048 = vsub.f32 %v1010, %v1038
          %v1049 = vsub.f32 %v1011, %v1038
          %v1050 = vsub.f32 %v1012, %v1038
          %v1051 = vsub.f32 %v1013, %v1038
          %v1052 = vsub.f32 %v1014, %v1038
          %v1053 = vsub.f32 %v1015, %v1038
          %v1054 = vsub.f32 %v1016, %v1038
          %v1055 = vmul.f32 %v1039, %v1039
          %v1056 = vmul.f32 %v1040, %v1040
          %v1057 = vmul.f32 %v1041, %v1041
          %v1058 = vmul.f32 %v1042, %v1042
          %v1059 = vmul.f32 %v1043, %v1043
          %v1060 = vmul.f32 %v1044, %v1044
          %v1061 = vmul.f32 %v1045, %v1045
          %v1062 = vmul.f32 %v1046, %v1046
          %v1063 = vmul.f32 %v1047, %v1047
          %v1064 = vmul.f32 %v1048, %v1048
          %v1065 = vmul.f32 %v1049, %v1049
          %v1066 = vmul.f32 %v1050, %v1050
          %v1067 = vmul.f32 %v1051, %v1051
          %v1068 = vmul.f32 %v1052, %v1052
          %v1069 = vmul.f32 %v1053, %v1053
          %v1070 = vmul.f32 %v1054, %v1054
          %v1071 = vadd.f32 %v1055, %v1056
          %v1072 = vadd.f32 %v1071, %v1057
          %v1073 = vadd.f32 %v1072, %v1058
          %v1074 = vadd.f32 %v1073, %v1059
          %v1075 = vadd.f32 %v1074, %v1060
          %v1076 = vadd.f32 %v1075, %v1061
          %v1077 = vadd.f32 %v1076, %v1062
          %v1078 = vadd.f32 %v1077, %v1063
          %v1079 = vadd.f32 %v1078, %v1064
          %v1080 = vadd.f32 %v1079, %v1065
          %v1081 = vadd.f32 %v1080, %v1066
          %v1082 = vadd.f32 %v1081, %v1067
          %v1083 = vadd.f32 %v1082, %v1068
          %v1084 = vadd.f32 %v1083, %v1069
          %v1085 = vadd.f32 %v1084, %v1070
          %v1086 = vrot.slane %v1085, 4
          %v1087 = vadd.f32 %v1085, %v1086
          %v1088 = vrot.slane %v1087, 2
          %v1089 = vadd.f32 %v1087, %v1088
          %v1090 = vrot.slane %v1089, 1
          %v1091 = vadd.f32 %v1089, %v1090
          %v1092 = vmul.f32 %v1091, %v676
          %v1093 = vld [vmem:[%s7] sm:$0x1]
          %v1094 = vadd.f32 %v1092, 1e-05
          %v1095 = vrsqrt.pop %v1094
          %v1096 = vmul.f32 %v1093, %v1095
          %v1098 = vlaneseq
          %v1099 = vshrl.u32 %v1098, 7
          %v1100 = vsub.s32 0, %v1099
          %v1101 = vrot.slane %v1096, %v1100
          %v1103 = vmul.f32 %v1039, %v1101
          %v1104 = vmul.f32 %v1040, %v1101
          %v1105 = vmul.f32 %v1041, %v1101
          %v1106 = vmul.f32 %v1042, %v1101
          %v1107 = vmul.f32 %v1043, %v1101
          %v1108 = vmul.f32 %v1044, %v1101
          %v1109 = vmul.f32 %v1045, %v1101
          %v1110 = vmul.f32 %v1046, %v1101
          %v1111 = vmul.f32 %v1047, %v1101
          %v1112 = vmul.f32 %v1048, %v1101
          %v1113 = vmul.f32 %v1049, %v1101
          %v1114 = vmul.f32 %v1050, %v1101
          %v1115 = vmul.f32 %v1051, %v1101
          %v1116 = vmul.f32 %v1052, %v1101
          %v1117 = vmul.f32 %v1053, %v1101
          %v1118 = vmul.f32 %v1054, %v1101
          %v1119 = vld [vmem:[%s8] sm:$0x1]
          %v1121 = vlaneseq
          %v1122 = vshrl.u32 %v1121, 7
          %v1123 = vsub.s32 0, %v1122
          %v1124 = vrot.slane %v1119, %v1123
          %v1126 = vadd.f32 %v1103, %v1124
          %v1127 = vadd.f32 %v1104, %v1124
          %v1128 = vadd.f32 %v1105, %v1124
          %v1129 = vadd.f32 %v1106, %v1124
          %v1130 = vadd.f32 %v1107, %v1124
          %v1131 = vadd.f32 %v1108, %v1124
          %v1132 = vadd.f32 %v1109, %v1124
          %v1133 = vadd.f32 %v1110, %v1124
          %v1134 = vadd.f32 %v1111, %v1124
          %v1135 = vadd.f32 %v1112, %v1124
          %v1136 = vadd.f32 %v1113, %v1124
          %v1137 = vadd.f32 %v1114, %v1124
          %v1138 = vadd.f32 %v1115, %v1124
          %v1139 = vadd.f32 %v1116, %v1124
          %v1140 = vadd.f32 %v1117, %v1124
          %v1141 = vadd.f32 %v1118, %v1124
          %v1142 = vmul.f32 %v1126, %v1126
          %v1143 = vmul.f32 %v1127, %v1127
          %v1144 = vmul.f32 %v1128, %v1128
          %v1145 = vmul.f32 %v1129, %v1129
          %v1146 = vmul.f32 %v1130, %v1130
          %v1147 = vmul.f32 %v1131, %v1131
          %v1148 = vmul.f32 %v1132, %v1132
          %v1149 = vmul.f32 %v1133, %v1133
          %v1150 = vmul.f32 %v1134, %v1134
          %v1151 = vmul.f32 %v1135, %v1135
          %v1152 = vmul.f32 %v1136, %v1136
          %v1153 = vmul.f32 %v1137, %v1137
          %v1154 = vmul.f32 %v1138, %v1138
          %v1155 = vmul.f32 %v1139, %v1139
          %v1156 = vmul.f32 %v1140, %v1140
          %v1157 = vmul.f32 %v1141, %v1141
          %1158 = vadd.xlane.f32.xlu0 %v1142
          %v1159 = vpop.xlane.xlu0 %1158
          %1160 = vadd.xlane.f32.xlu0 %v1143
          %v1161 = vpop.xlane.xlu0 %1160
          %1162 = vadd.xlane.f32.xlu0 %v1144
          %v1163 = vpop.xlane.xlu0 %1162
          %1164 = vadd.xlane.f32.xlu0 %v1145
          %v1165 = vpop.xlane.xlu0 %1164
          %1166 = vadd.xlane.f32.xlu0 %v1146
          %v1167 = vpop.xlane.xlu0 %1166
          %1168 = vadd.xlane.f32.xlu0 %v1147
          %v1169 = vpop.xlane.xlu0 %1168
          %1170 = vadd.xlane.f32.xlu0 %v1148
          %v1171 = vpop.xlane.xlu0 %1170
          %1172 = vadd.xlane.f32.xlu0 %v1149
          %v1173 = vpop.xlane.xlu0 %1172
          %1174 = vadd.xlane.f32.xlu0 %v1150
          %v1175 = vpop.xlane.xlu0 %1174
          %1176 = vadd.xlane.f32.xlu0 %v1151
          %v1177 = vpop.xlane.xlu0 %1176
          %1178 = vadd.xlane.f32.xlu0 %v1152
          %v1179 = vpop.xlane.xlu0 %1178
          %1180 = vadd.xlane.f32.xlu0 %v1153
          %v1181 = vpop.xlane.xlu0 %1180
          %1182 = vadd.xlane.f32.xlu0 %v1154
          %v1183 = vpop.xlane.xlu0 %1182
          %1184 = vadd.xlane.f32.xlu0 %v1155
          %v1185 = vpop.xlane.xlu0 %1184
          %1186 = vadd.xlane.f32.xlu0 %v1156
          %v1187 = vpop.xlane.xlu0 %1186
          %1188 = vadd.xlane.f32.xlu0 %v1157
          %v1189 = vpop.xlane.xlu0 %1188
          %v1190 = vrsqrt.pop %v1159
          %v1191 = vmul.f32 %v1159, %v1190
          %vm1192 = vcmp.eq.f32.partialorder %v1159, inf
          %v1193 = vsel %vm1192, %v1159, %v1191
          %vm1194 = vcmp.eq.f32.partialorder %v1159, 0.0
          %v1195 = vand.u32 %v1159, 2147483648
          %v1196 = vsel %vm1194, %v1195, %v1193
          %v1197 = vrsqrt.pop %v1161
          %v1198 = vmul.f32 %v1161, %v1197
          %vm1199 = vcmp.eq.f32.partialorder %v1161, inf
          %v1200 = vsel %vm1199, %v1161, %v1198
          %vm1201 = vcmp.eq.f32.partialorder %v1161, 0.0
          %v1202 = vand.u32 %v1161, 2147483648
          %v1203 = vsel %vm1201, %v1202, %v1200
          %v1204 = vrsqrt.pop %v1163
          %v1205 = vmul.f32 %v1163, %v1204
          %vm1206 = vcmp.eq.f32.partialorder %v1163, inf
          %v1207 = vsel %vm1206, %v1163, %v1205
          %vm1208 = vcmp.eq.f32.partialorder %v1163, 0.0
          %v1209 = vand.u32 %v1163, 2147483648
          %v1210 = vsel %vm1208, %v1209, %v1207
          %v1211 = vrsqrt.pop %v1165
          %v1212 = vmul.f32 %v1165, %v1211
          %vm1213 = vcmp.eq.f32.partialorder %v1165, inf
          %v1214 = vsel %vm1213, %v1165, %v1212
          %vm1215 = vcmp.eq.f32.partialorder %v1165, 0.0
          %v1216 = vand.u32 %v1165, 2147483648
          %v1217 = vsel %vm1215, %v1216, %v1214
          %v1218 = vrsqrt.pop %v1167
          %v1219 = vmul.f32 %v1167, %v1218
          %vm1220 = vcmp.eq.f32.partialorder %v1167, inf
          %v1221 = vsel %vm1220, %v1167, %v1219
          %vm1222 = vcmp.eq.f32.partialorder %v1167, 0.0
          %v1223 = vand.u32 %v1167, 2147483648
          %v1224 = vsel %vm1222, %v1223, %v1221
          %v1225 = vrsqrt.pop %v1169
          %v1226 = vmul.f32 %v1169, %v1225
          %vm1227 = vcmp.eq.f32.partialorder %v1169, inf
          %v1228 = vsel %vm1227, %v1169, %v1226
          %vm1229 = vcmp.eq.f32.partialorder %v1169, 0.0
          %v1230 = vand.u32 %v1169, 2147483648
          %v1231 = vsel %vm1229, %v1230, %v1228
          %v1232 = vrsqrt.pop %v1171
          %v1233 = vmul.f32 %v1171, %v1232
          %vm1234 = vcmp.eq.f32.partialorder %v1171, inf
          %v1235 = vsel %vm1234, %v1171, %v1233
          %vm1236 = vcmp.eq.f32.partialorder %v1171, 0.0
          %v1237 = vand.u32 %v1171, 2147483648
          %v1238 = vsel %vm1236, %v1237, %v1235
          %v1239 = vrsqrt.pop %v1173
          %v1240 = vmul.f32 %v1173, %v1239
          %vm1241 = vcmp.eq.f32.partialorder %v1173, inf
          %v1242 = vsel %vm1241, %v1173, %v1240
          %vm1243 = vcmp.eq.f32.partialorder %v1173, 0.0
          %v1244 = vand.u32 %v1173, 2147483648
          %v1245 = vsel %vm1243, %v1244, %v1242
          %v1246 = vrsqrt.pop %v1175
          %v1247 = vmul.f32 %v1175, %v1246
          %vm1248 = vcmp.eq.f32.partialorder %v1175, inf
          %v1249 = vsel %vm1248, %v1175, %v1247
          %vm1250 = vcmp.eq.f32.partialorder %v1175, 0.0
          %v1251 = vand.u32 %v1175, 2147483648
          %v1252 = vsel %vm1250, %v1251, %v1249
          %v1253 = vrsqrt.pop %v1177
          %v1254 = vmul.f32 %v1177, %v1253
          %vm1255 = vcmp.eq.f32.partialorder %v1177, inf
          %v1256 = vsel %vm1255, %v1177, %v1254
          %vm1257 = vcmp.eq.f32.partialorder %v1177, 0.0
          %v1258 = vand.u32 %v1177, 2147483648
          %v1259 = vsel %vm1257, %v1258, %v1256
          %v1260 = vrsqrt.pop %v1179
          %v1261 = vmul.f32 %v1179, %v1260
          %vm1262 = vcmp.eq.f32.partialorder %v1179, inf
          %v1263 = vsel %vm1262, %v1179, %v1261
          %vm1264 = vcmp.eq.f32.partialorder %v1179, 0.0
          %v1265 = vand.u32 %v1179, 2147483648
          %v1266 = vsel %vm1264, %v1265, %v1263
          %v1267 = vrsqrt.pop %v1181
          %v1268 = vmul.f32 %v1181, %v1267
          %vm1269 = vcmp.eq.f32.partialorder %v1181, inf
          %v1270 = vsel %vm1269, %v1181, %v1268
          %vm1271 = vcmp.eq.f32.partialorder %v1181, 0.0
          %v1272 = vand.u32 %v1181, 2147483648
          %v1273 = vsel %vm1271, %v1272, %v1270
          %v1274 = vrsqrt.pop %v1183
          %v1275 = vmul.f32 %v1183, %v1274
          %vm1276 = vcmp.eq.f32.partialorder %v1183, inf
          %v1277 = vsel %vm1276, %v1183, %v1275
          %vm1278 = vcmp.eq.f32.partialorder %v1183, 0.0
          %v1279 = vand.u32 %v1183, 2147483648
          %v1280 = vsel %vm1278, %v1279, %v1277
          %v1281 = vrsqrt.pop %v1185
          %v1282 = vmul.f32 %v1185, %v1281
          %vm1283 = vcmp.eq.f32.partialorder %v1185, inf
          %v1284 = vsel %vm1283, %v1185, %v1282
          %vm1285 = vcmp.eq.f32.partialorder %v1185, 0.0
          %v1286 = vand.u32 %v1185, 2147483648
          %v1287 = vsel %vm1285, %v1286, %v1284
          %v1288 = vrsqrt.pop %v1187
          %v1289 = vmul.f32 %v1187, %v1288
          %vm1290 = vcmp.eq.f32.partialorder %v1187, inf
          %v1291 = vsel %vm1290, %v1187, %v1289
          %vm1292 = vcmp.eq.f32.partialorder %v1187, 0.0
          %v1293 = vand.u32 %v1187, 2147483648
          %v1294 = vsel %vm1292, %v1293, %v1291
          %v1295 = vrsqrt.pop %v1189
          %v1296 = vmul.f32 %v1189, %v1295
          %vm1297 = vcmp.eq.f32.partialorder %v1189, inf
          %v1298 = vsel %vm1297, %v1189, %v1296
          %vm1299 = vcmp.eq.f32.partialorder %v1189, 0.0
          %v1300 = vand.u32 %v1189, 2147483648
          %v1301 = vsel %vm1299, %v1300, %v1298
          %v1302 = vmax.f32 %v1196, 1e-12
          %v1303 = vmax.f32 %v1203, 1e-12
          %v1304 = vmax.f32 %v1210, 1e-12
          %v1305 = vmax.f32 %v1217, 1e-12
          %v1306 = vmax.f32 %v1224, 1e-12
          %v1307 = vmax.f32 %v1231, 1e-12
          %v1308 = vmax.f32 %v1238, 1e-12
          %v1309 = vmax.f32 %v1245, 1e-12
          %v1310 = vmax.f32 %v1252, 1e-12
          %v1311 = vmax.f32 %v1259, 1e-12
          %v1312 = vmax.f32 %v1266, 1e-12
          %v1313 = vmax.f32 %v1273, 1e-12
          %v1314 = vmax.f32 %v1280, 1e-12
          %v1315 = vmax.f32 %v1287, 1e-12
          %v1316 = vmax.f32 %v1294, 1e-12
          %v1317 = vmax.f32 %v1301, 1e-12
          %v1318 = vrcp.pop %v1302
          %v1319 = vmul.f32 %v1126, %v1318
          %v1320 = vrcp.pop %v1303
          %v1321 = vmul.f32 %v1127, %v1320
          %v1322 = vrcp.pop %v1304
          %v1323 = vmul.f32 %v1128, %v1322
          %v1324 = vrcp.pop %v1305
          %v1325 = vmul.f32 %v1129, %v1324
          %v1326 = vrcp.pop %v1306
          %v1327 = vmul.f32 %v1130, %v1326
          %v1328 = vrcp.pop %v1307
          %v1329 = vmul.f32 %v1131, %v1328
          %v1330 = vrcp.pop %v1308
          %v1331 = vmul.f32 %v1132, %v1330
          %v1332 = vrcp.pop %v1309
          %v1333 = vmul.f32 %v1133, %v1332
          %v1334 = vrcp.pop %v1310
          %v1335 = vmul.f32 %v1134, %v1334
          %v1336 = vrcp.pop %v1311
          %v1337 = vmul.f32 %v1135, %v1336
          %v1338 = vrcp.pop %v1312
          %v1339 = vmul.f32 %v1136, %v1338
          %v1340 = vrcp.pop %v1313
          %v1341 = vmul.f32 %v1137, %v1340
          %v1342 = vrcp.pop %v1314
          %v1343 = vmul.f32 %v1138, %v1342
          %v1344 = vrcp.pop %v1315
          %v1345 = vmul.f32 %v1139, %v1344
          %v1346 = vrcp.pop %v1316
          %v1347 = vmul.f32 %v1140, %v1346
          %v1348 = vrcp.pop %v1317
          %v1349 = vmul.f32 %v1141, %v1348
          %1350 = vst [vmem:[#allocation9] sm:$0xff] %v1319
          %1351 = vst [vmem:[#allocation9 + $0x8] sm:$0xff] %v1321
          %1352 = vst [vmem:[#allocation9 + $0x10] sm:$0xff] %v1323
          %1353 = vst [vmem:[#allocation9 + $0x18] sm:$0xff] %v1325
          %1354 = vst [vmem:[#allocation9 + $0x20] sm:$0xff] %v1327
          %1355 = vst [vmem:[#allocation9 + $0x28] sm:$0xff] %v1329
          %1356 = vst [vmem:[#allocation9 + $0x30] sm:$0xff] %v1331
          %1357 = vst [vmem:[#allocation9 + $0x38] sm:$0xff] %v1333
          %1358 = vst [vmem:[#allocation9 + $0x40] sm:$0xff] %v1335
          %1359 = vst [vmem:[#allocation9 + $0x48] sm:$0xff] %v1337
          %1360 = vst [vmem:[#allocation9 + $0x50] sm:$0xff] %v1339
          %1361 = vst [vmem:[#allocation9 + $0x58] sm:$0xff] %v1341
          %1362 = vst [vmem:[#allocation9 + $0x60] sm:$0xff] %v1343
          %1363 = vst [vmem:[#allocation9 + $0x68] sm:$0xff] %v1345
          %1364 = vst [vmem:[#allocation9 + $0x70] sm:$0xff] %v1347
          %1365 = vst [vmem:[#allocation9 + $0x78] sm:$0xff] %v1349
        $region76: #{projection_head_forward.1} parent=55 // pred_fallthru
          _
        // Predicated region
        $region77: #{projection_head_forward.1} parent=55 // pred_check
          %p1366 = pneg %p252
        $region78: #{projection_head_forward.1} parent=55 // pred_check_branch
          %1368 = sbr.rel (%p1366) target = $region80
        $region79: #{projection_head_forward.1} parent=55 // pred_region
          %s1370 = ssub.s32 2048, 2048
          %1371 = vsyncadd [#allocation5], %s1370
          %s1372 = sshll.u32 [#allocation9], 4
          %s1373 = int_to_ptr.vmem [resolvable:$true] %s1372
          %1378 = dma.vmem_to_hbm [thread:$0]  %s1373, 2048, %s9, [#allocation5], 128, 128, 8
        $region80: #{projection_head_forward.1} parent=55 // pred_fallthru
          _
        // Predicated region
        $region81: #{projection_head_forward.1} parent=55 // pred_check
          %p1379 = pneg %p252
        $region82: #{projection_head_forward.1} parent=55 // pred_check_branch
          %1381 = sbr.rel (%p1379) target = $region84
        $region83: #{projection_head_forward.1} parent=55 // pred_region
          %1382 = dma.done [#allocation5], 2048
        $region84: #{projection_head_forward.1} parent=55 // pred_fallthru
          _
      $region56: #{projection_head_forward.1} parent=5 // pred_fallthru
        _
      %p1383 = scmp.le.s32.totalorder 2, %s20
      // Predicated region
      $region85: #{projection_head_forward.1} parent=5 // pred_check
        %p1384 = pneg %p1383
      $region86: #{projection_head_forward.1} parent=5 // pred_check_branch
        %1386 = sbr.rel (%p1384) target = $region88
      $region87: #{projection_head_forward.1} parent=5 // pred_region
        %s1387 = ssub.s32 %s20, 2
      $region88: #{projection_head_forward.1} parent=5 // pred_fallthru
        _
    $region6: #{projection_head_forward.1} parent=1 // loop_footer
      %s24 = sadd.s32 1, %s20
    $region7: #{projection_head_forward.1} parent=1 // loop_footer_branch
      %19 = sbr.rel target = $region3
    $region8: #{projection_head_forward.1} parent=1 // loop_exit
      _
    %1388 = vsyncpa [#allocation4], 1
    %s1389 = scalar_lea.sflag [#allocation4], 1
    %1390 = vsyncpa %s1389, 1
    %1391 = vsyncpa [#allocation7], 1
    %s1392 = scalar_lea.sflag [#allocation7], 1
    %1393 = vsyncpa %s1392, 1
    %1394 = vsyncpa [#allocation5], 1
    %s1395 = scalar_lea.sflag [#allocation5], 1
    %1396 = vsyncpa %s1395, 1

</llo_original>
